<compile_context>
chip_gen: v6e
topology: v6e:2x2x1
jax: 0.10.0
libtpu: 0.0.40
codegen_flags: <defaults>
</compile_context>

<pallas_src>
import math

import jax
import jax.numpy as jnp
import numpy as np
from jax.experimental import pallas as pl
from jax.experimental.pallas import tpu as pltpu


# --------------------------- small host-side helpers ---------------------------

def _is_bf16_friendly():
    """True on TPU generations with native bf16 VPU/EUP (v6e, v7x)."""
    try:
        kind = jax.devices()[0].device_kind.lower()
    except Exception:
        return False
    return ("v6" in kind) or ("v7" in kind)


def _vmem_limit_bytes():
    """Scoped-VMEM cap: ~100 MiB on 128-MiB parts (v5e/v6e), physical minus headroom on v7x."""
    try:
        cap = int(pltpu.get_tpu_info().vmem_capacity_bytes)
    except Exception:
        return 64 * 1024 * 1024
    return int(max(32 * 1024 * 1024, min(cap - 24 * 1024 * 1024, 100 * 1024 * 1024)))


def _pick_q_tile(L, cap):
    """Largest 128-multiple divisor of L that is <= cap (or L itself if L <= cap)."""
    if L <= cap:
        return L
    t = (cap // 128) * 128
    while t >= 128:
        if L % t == 0:
            return t
        t -= 128
    return L


# ------------------------------- fused kernel ----------------------------------

def _make_decoder_cell_kernel(C, Cout, L, q_tile, eps, mxu_dtype, softmax_dtype,
                              approx_recip):
    f32 = jnp.float32
    STD = (((1,), (0,)), ((), ()))   # (m,k)@(k,n): weights consumed as stored
    CC0 = (((0,), (0,)), ((), ()))   # contract dim 0 of both: (k,m),(k,n)->(m,n)
    n_tq = L // q_tile

    def _sigmoid(x):  # keep sigmoid math in f32 (bf16 exp overflows earlier)
        return pl.reciprocal(1.0 + jnp.exp(-x), approx=approx_recip)

    def _inorm_relu(x):  # InstanceNorm2d (affine=False) over spatial (lane) axis + ReLU
        mu = jnp.mean(x, axis=-1, keepdims=True)
        var = jnp.mean((x - mu) * (x - mu), axis=-1, keepdims=True)
        return jnp.maximum((x - mu) * jax.lax.rsqrt(var + eps), 0.0)

    def kernel(en_ref, dec_ref, wconv_ref, w3_ref, wattn_ref, b_ref,
               dec_out_ref, logits_ref, y_ref):
        en = en_ref[0].astype(f32)            # (C, L)
        dec = dec_ref[0].astype(f32)          # (C, L)
        wc = wconv_ref[...].astype(f32)       # (C + Cout, 2C) = [w1; w2]
        w3 = w3_ref[...].astype(f32)          # (1, Cout)
        wa = wattn_ref[...].astype(f32)       # (4C, C)  = [Aq/sqrt(C); Ak; Wv; Wo]
        b = b_ref[...].astype(f32)            # (5C + Cout + 1, 1), all biases bundled

        b_qkv = b[0:3 * C]                    # (3C, 1)
        b_o = b[3 * C:4 * C]                  # (C, 1)
        b_1 = b[4 * C:5 * C]                  # (C, 1)
        b_2 = b[5 * C:5 * C + Cout]           # (Cout, 1)
        b_3 = b[5 * C + Cout:5 * C + Cout + 1]  # (1, 1)

        # ---- en = relu(InstanceNorm(en)); fmap = conv1([en_r; dec]) (one K=2C matmul) ----
        x1 = jnp.concatenate([_inorm_relu(en), dec], axis=0)            # (2C, L)
        w1 = wc[0:C]                                                     # (C, 2C)
        fmap = jax.lax.dot_general(w1, x1, STD, preferred_element_type=f32) + b_1
        logits_ref[0] = _sigmoid(fmap).astype(logits_ref.dtype)          # pre-ReLU
        fmap = jnp.maximum(fmap, 0.0)

        # ---- GAM: folded 1x1-conv + MHA in-proj -> one (3C, C) @ (C, L) matmul ----
        x_m = fmap.astype(mxu_dtype)
        w_qkv = wa[0:3 * C].astype(mxu_dtype)                            # (3C, C)
        w_out = wa[3 * C:4 * C].astype(mxu_dtype)                        # (C, C)
        qkv = jax.lax.dot_general(w_qkv, x_m, STD,
                                  preferred_element_type=f32) + b_qkv    # (3C, L)
        q = qkv[0:C].astype(mxu_dtype)                                   # (C, L)
        k = qkv[C:2 * C].astype(mxu_dtype)                               # (C, L)
        v = qkv[2 * C:3 * C].astype(mxu_dtype)                           # (C, L)

        # ---- attention, tiled over the query axis (static unroll) ----
        # Scores laid out keys-on-sublanes x queries-on-lanes: no transposes, and the
        # softmax denominator is already a (1, TQ) row vector.  Normalization happens
        # AFTER the PV matmul (C*TQ multiplies instead of L*TQ).
        parts = []
        for t in range(n_tq):
            q_t = q[:, t * q_tile:(t + 1) * q_tile]                      # (C, TQ)
            s = jax.lax.dot_general(k, q_t, CC0,
                                    preferred_element_type=f32)          # (L, TQ)
            s = s.astype(softmax_dtype)
            m = jnp.max(s, axis=0, keepdims=True)                        # (1, TQ)
            p = jnp.exp(s - m)                                           # (L, TQ)
            denom = jnp.sum(p, axis=0, keepdims=True, dtype=f32)         # (1, TQ) f32
            o_t = jax.lax.dot_general(v, p.astype(mxu_dtype), STD,
                                      preferred_element_type=f32)        # (C, TQ)
            if approx_recip:
                o_t = o_t * pl.reciprocal(denom, approx=True)            # EUP slot
            else:
                o_t = o_t / denom
            parts.append(o_t)
        o = parts[0] if n_tq == 1 else jnp.concatenate(parts, axis=1)    # (C, L)
        att = jax.lax.dot_general(w_out, o.astype(mxu_dtype), STD,
                                  preferred_element_type=f32) + b_o      # (C, L)

        # ---- conv2([fmap; att]) (one K=2C matmul) -> InstanceNorm -> ReLU ----
        x2 = jnp.concatenate([fmap, att], axis=0)                        # (2C, L)
        w2 = wc[C:C + Cout]                                              # (Cout, 2C)
        h2 = jax.lax.dot_general(w2, x2, STD, preferred_element_type=f32) + b_2
        dn = _inorm_relu(h2)                                             # (Cout, L)
        dec_out_ref[0] = dn.astype(dec_out_ref.dtype)

        # ---- conv3 + sigmoid ----
        y = jax.lax.dot_general(w3, dn, STD, preferred_element_type=f32) + b_3  # (1, L)
        y_ref[0] = _sigmoid(y).astype(y_ref.dtype)

    return kernel


# ------------------------------ parameter packing -------------------------------

def pack_params(params, C, Cout):
    """Fold GAM's 1x1 conv (and 1/sqrt(C)) into the MHA in-proj and bundle params."""
    p = params
    hp = jax.lax.Precision.HIGHEST
    Wq, Wk, Wv = p["w_in"][:C], p["w_in"][C:2 * C], p["w_in"][2 * C:3 * C]
    bq, bk, bv = p["b_in"][:C], p["b_in"][C:2 * C], p["b_in"][2 * C:3 * C]
    Wcq, Wck = p["wg"][:C], p["wg"][C:2 * C]
    bcq, bck = p["bg"][:C], p["bg"][C:2 * C]
    scale = 1.0 / math.sqrt(C)

    aq = jnp.matmul(Wq, Wcq, precision=hp) * scale
    cq = (jnp.matmul(Wq, bcq, precision=hp) + bq) * scale
    ak = jnp.matmul(Wk, Wck, precision=hp)
    ck = jnp.matmul(Wk, bck, precision=hp) + bk

    w_attn = jnp.concatenate([aq, ak, Wv, p["wo"]], axis=0)               # (4C, C)
    w_conv = jnp.concatenate([p["w1"], p["w2"]], axis=0)                  # (C+Cout, 2C)
    b_all = jnp.concatenate([cq, ck, bv, p["bo"], p["b1"], p["b2"],
                             p["b3"]], axis=0)[:, None]                   # (5C+Cout+1, 1)
    return w_conv, p["w3"], w_attn, b_all


# --------------------------------- entry point ----------------------------------

def decoder_cell_forward(en, dec, params, *, out_channel, eps=1e-5,
                         mxu_dtype=None, softmax_dtype=None,
                         out_dtype=jnp.bfloat16, approx_recip=True, q_tile=512):
    """DecoderCell.forward (mode='G') -> (dec_out, feature_ranking_logits, _y).

    mxu_dtype / softmax_dtype default to bf16 on v6e/v7x and f32 on v5e (no bf16 VPU/EUP).
    """
    if dec is None:
        dec = en
    elif dec.shape[2] * 2 == en.shape[2]:
        # F.interpolate(scale_factor=2, mode='nearest'), done in the wrapper (layout only).
        dec = jnp.repeat(jnp.repeat(dec, 2, axis=2), 2, axis=3)
    else:
        assert dec.shape[2] == en.shape[2]

    B, C, H, W = en.shape
    Cout = out_channel
    L = H * W
    # Keep all in-kernel (value) slices sublane-aligned.
    assert C % 8 == 0 and Cout % 8 == 0, "channel counts must be multiples of 8"

    bf16_ok = _is_bf16_friendly()
    if mxu_dtype is None:
        mxu_dtype = jnp.bfloat16 if bf16_ok else jnp.float32
    if softmax_dtype is None:
        softmax_dtype = jnp.bfloat16 if bf16_ok else jnp.float32

    tq = _pick_q_tile(L, q_tile)

    w_conv, w3, w_attn, b_all = pack_params(params, C, Cout)

    # Channels-first (flattened NCHW): lane dim is L -> lane-dense loads/stores.
    en_cl = en.reshape(B, C, L)
    dec_cl = dec.reshape(B, C, L)

    kernel = _make_decoder_cell_kernel(C, Cout, L, tq, eps, mxu_dtype,
                                       softmax_dtype, approx_recip)

    def const_spec(arr):
        zeros = (0,) * arr.ndim
        return pl.BlockSpec(arr.shape, lambda b: zeros)

    def batch_spec(ch):
        return pl.BlockSpec((1, ch, L), lambda b: (b, 0, 0))

    dec_out, logits, y = pl.pallas_call(
        kernel,
        grid=(B,),
        in_specs=[batch_spec(C), batch_spec(C),
                  const_spec(w_conv), const_spec(w3),
                  const_spec(w_attn), const_spec(b_all)],
        out_specs=(pl.BlockSpec((1, Cout, L), lambda b: (b, 0, 0)),
                   pl.BlockSpec((1, C, L), lambda b: (b, 0, 0)),
                   pl.BlockSpec((1, 1, L), lambda b: (b, 0, 0))),
        out_shape=(jax.ShapeDtypeStruct((B, Cout, L), out_dtype),
                   jax.ShapeDtypeStruct((B, C, L), out_dtype),
                   jax.ShapeDtypeStruct((B, 1, L), out_dtype)),
        compiler_params=pltpu.CompilerParams(
            dimension_semantics=("parallel",),
            vmem_limit_bytes=_vmem_limit_bytes()),
    )(en_cl, dec_cl, w_conv, w3, w_attn, b_all)

    return (dec_out.reshape(B, Cout, H, W),
            logits.reshape(B, C, H, W),
            y.reshape(B, 1, H, W))


# ------------------------- pure-JAX reference & params -------------------------

def decoder_cell_reference(en, dec, params, *, eps=1e-5):
    p = params
    if dec is None:
        dec = en
    elif dec.shape[2] * 2 == en.shape[2]:
        dec = jnp.repeat(jnp.repeat(dec, 2, axis=2), 2, axis=3)

    def conv1x1(x, w, b):
        return jnp.einsum("oc,bchw->bohw", w, x) + b[None, :, None, None]

    def inorm(x):
        mu = jnp.mean(x, axis=(2, 3), keepdims=True)
        var = jnp.mean((x - mu) ** 2, axis=(2, 3), keepdims=True)
        return (x - mu) / jnp.sqrt(var + eps)

    B, C, H, W = en.shape
    L = H * W
    en_n = jax.nn.relu(inorm(en))
    fmap = conv1x1(jnp.concatenate([en_n, dec], axis=1), p["w1"], p["b1"])
    logits = jax.nn.sigmoid(fmap)
    fmap = jax.nn.relu(fmap)

    # GAM
    qk = conv1x1(fmap, p["wg"], p["bg"])
    q = qk[:, :C].reshape(B, C, L).transpose(0, 2, 1)
    k = qk[:, C:].reshape(B, C, L).transpose(0, 2, 1)
    x2 = fmap.reshape(B, C, L).transpose(0, 2, 1)
    Wq, Wk, Wv = p["w_in"][:C], p["w_in"][C:2 * C], p["w_in"][2 * C:]
    bq, bk, bv = p["b_in"][:C], p["b_in"][C:2 * C], p["b_in"][2 * C:]
    Q = q @ Wq.T + bq
    K = k @ Wk.T + bk
    V = x2 @ Wv.T + bv
    s = jnp.einsum("blc,bmc->blm", Q, K) / math.sqrt(C)
    a = jax.nn.softmax(s, axis=-1)
    o = jnp.einsum("blm,bmc->blc", a, V)
    att = (o @ p["wo"].T + p["bo"]).transpose(0, 2, 1).reshape(B, C, H, W)

    x3 = conv1x1(jnp.concatenate([fmap, att], axis=1), p["w2"], p["b2"])
    dec_out = jax.nn.relu(inorm(x3))
    y = jax.nn.sigmoid(conv1x1(dec_out, p["w3"], p["b3"]))
    return dec_out, logits, y


def make_params(key, C, Cout):
    """Deterministic synthetic parameters matching DecoderCell('G') shapes."""
    ks = jax.random.split(key, 12)

    def w(k, shape, s=0.2):
        return s * jax.random.normal(k, shape, jnp.float32)

    return {
        "w1": w(ks[0], (C, 2 * C)),     "b1": w(ks[1], (C,), 0.1),       # conv1: 2C->C
        "wg": w(ks[2], (2 * C, C)),     "bg": w(ks[3], (2 * C,), 0.1),   # GAM conv: C->2C
        "w_in": w(ks[4], (3 * C, C)),   "b_in": w(ks[5], (3 * C,), 0.1), # MHA in-proj
        "wo": w(ks[6], (C, C)),         "bo": w(ks[7], (C,), 0.1),       # MHA out-proj
        "w2": w(ks[8], (Cout, 2 * C)),  "b2": w(ks[9], (Cout,), 0.1),    # conv2: 2C->Cout
        "w3": w(ks[10], (1, Cout)),     "b3": w(ks[11], (1,), 0.1),      # conv3: Cout->1
    }


def _to_f32(x):
    return np.asarray(jnp.asarray(x, jnp.float32))


if __name__ == "__main__":
    B, C, COUT, H, W = 2, 8, 8, 16, 16
    key = jax.random.PRNGKey(0)
    k_en, k_dec, k_p = jax.random.split(key, 3)
    en = jax.random.normal(k_en, (B, C, H, W), jnp.float32)
    dec = jax.random.normal(k_dec, (B, C, H, W), jnp.float32)
    params = make_params(k_p, C, COUT)

    # Ground-truth reference with full-precision f32 matmuls.
    with jax.default_matmul_precision("highest"):
        ref = decoder_cell_reference(en, dec, params)
        ref_none = decoder_cell_reference(en, None, params)

    # 1) exactness check: f32 MXU operands + f32 softmax + exact reciprocal + f32
    #    outputs (tolerance covers MXU f32 pass decomposition and weight folding).
    out_f32 = jax.block_until_ready(
        decoder_cell_forward(en, dec, params, out_channel=COUT,
                             mxu_dtype=jnp.float32, softmax_dtype=jnp.float32,
                             out_dtype=jnp.float32, approx_recip=False))
    for got, want in zip(out_f32, ref):
        np.testing.assert_allclose(_to_f32(got), _to_f32(want), rtol=1e-2, atol=1e-2)

    # 2) fast path: bf16 MXU operands, gen-aware softmax dtype (bf16 on v6e/v7x,
    #    f32 on v5e), approx reciprocal, bf16 outputs.
    out_fast = jax.block_until_ready(
        decoder_cell_forward(en, dec, params, out_channel=COUT,
                             mxu_dtype=jnp.bfloat16))
    for got, want in zip(out_fast, ref):
        np.testing.assert_allclose(_to_f32(got), _to_f32(want), rtol=4e-2, atol=4e-2)

    # 3) the `input[1] is None` branch of DecoderCell.forward (dec = en), fast path.
    out_none = jax.block_until_ready(
        decoder_cell_forward(en, None, params, out_channel=COUT,
                             mxu_dtype=jnp.bfloat16))
    for got, want in zip(out_none, ref_none):
        np.testing.assert_allclose(_to_f32(got), _to_f32(want), rtol=4e-2, atol=4e-2)

    print("KERNEL_OK")
</pallas_src>

<mosaic_0001>
module attributes {stable_mosaic.version = 11 : i64} {
  func.func @kernel(%arg0: i32, %arg1: memref<1x8x256xf32, #tpu.memory_space<vmem>>, %arg2: memref<1x8x256xf32, #tpu.memory_space<vmem>>, %arg3: memref<16x16xf32, #tpu.memory_space<vmem>>, %arg4: memref<1x8xf32, #tpu.memory_space<vmem>>, %arg5: memref<32x8xf32, #tpu.memory_space<vmem>>, %arg6: memref<49x1xf32, #tpu.memory_space<vmem>>, %arg7: memref<1x8x256xf32, #tpu.memory_space<vmem>>, %arg8: memref<1x8x256xf32, #tpu.memory_space<vmem>>, %arg9: memref<1x1x256xf32, #tpu.memory_space<vmem>>) attributes {dimension_semantics = [#tpu.dimension_semantics<parallel>], iteration_bounds = array<i64: 2>, scalar_prefetch = 0 : i64, scratch_operands = 0 : i64, tpu.core_type = #tpu.core_type<tc>, window_params = [{transform_indices = @transform_0, window_bounds = array<i64: 1, 8, 256>}, {transform_indices = @transform_1, window_bounds = array<i64: 1, 8, 256>}, {pipeline_mode = #tpu.pipeline_mode<synchronous>, transform_indices = @transform_2, window_bounds = array<i64: 16, 16>}, {pipeline_mode = #tpu.pipeline_mode<synchronous>, transform_indices = @transform_3, window_bounds = array<i64: 1, 8>}, {pipeline_mode = #tpu.pipeline_mode<synchronous>, transform_indices = @transform_4, window_bounds = array<i64: 32, 8>}, {pipeline_mode = #tpu.pipeline_mode<synchronous>, transform_indices = @transform_5, window_bounds = array<i64: 49, 1>}, {transform_indices = @transform_6, window_bounds = array<i64: 1, 8, 256>}, {transform_indices = @transform_7, window_bounds = array<i64: 1, 8, 256>}, {transform_indices = @transform_8, window_bounds = array<i64: 1, 1, 256>}]} {
    %c0 = arith.constant 0 : index
    %c0_0 = arith.constant 0 : index
    %c0_1 = arith.constant 0 : index
    %0 = vector.load %arg1[%c0, %c0_0, %c0_1] : memref<1x8x256xf32, #tpu.memory_space<vmem>>, vector<1x8x256xf32>
    %1 = vector.shape_cast %0 : vector<1x8x256xf32> to vector<8x256xf32>
    %c0_2 = arith.constant 0 : index
    %c0_3 = arith.constant 0 : index
    %c0_4 = arith.constant 0 : index
    %2 = vector.load %arg2[%c0_2, %c0_3, %c0_4] : memref<1x8x256xf32, #tpu.memory_space<vmem>>, vector<1x8x256xf32>
    %3 = vector.shape_cast %2 : vector<1x8x256xf32> to vector<8x256xf32>
    %c0_5 = arith.constant 0 : index
    %c0_6 = arith.constant 0 : index
    %4 = vector.load %arg3[%c0_5, %c0_6] : memref<16x16xf32, #tpu.memory_space<vmem>>, vector<16x16xf32>
    %c0_7 = arith.constant 0 : index
    %c0_8 = arith.constant 0 : index
    %5 = vector.load %arg4[%c0_7, %c0_8] : memref<1x8xf32, #tpu.memory_space<vmem>>, vector<1x8xf32>
    %c0_9 = arith.constant 0 : index
    %c0_10 = arith.constant 0 : index
    %6 = vector.load %arg5[%c0_9, %c0_10] : memref<32x8xf32, #tpu.memory_space<vmem>>, vector<32x8xf32>
    %c0_11 = arith.constant 0 : index
    %c0_12 = arith.constant 0 : index
    %7 = vector.load %arg6[%c0_11, %c0_12] : memref<49x1xf32, #tpu.memory_space<vmem>>, vector<49x1xf32>
    %8 = vector.extract_strided_slice %7 {offsets = [0, 0], sizes = [24, 1], strides = [1, 1]} : vector<49x1xf32> to vector<24x1xf32>
    %9 = vector.extract_strided_slice %7 {offsets = [24, 0], sizes = [8, 1], strides = [1, 1]} : vector<49x1xf32> to vector<8x1xf32>
    %10 = vector.extract_strided_slice %7 {offsets = [32, 0], sizes = [8, 1], strides = [1, 1]} : vector<49x1xf32> to vector<8x1xf32>
    %11 = vector.extract_strided_slice %7 {offsets = [40, 0], sizes = [8, 1], strides = [1, 1]} : vector<49x1xf32> to vector<8x1xf32>
    %12 = vector.extract_strided_slice %7 {offsets = [48, 0], sizes = [1, 1], strides = [1, 1]} : vector<49x1xf32> to vector<1x1xf32>
    %cst = arith.constant dense<0.000000e+00> : vector<8xf32>
    %13 = vector.multi_reduction <add>, %1, %cst [1] : vector<8x256xf32> to vector<8xf32>
    %14 = vector.shape_cast %13 : vector<8xf32> to vector<8x1xf32>
    %cst_13 = arith.constant 2.560000e+02 : f32
    %15 = vector.broadcast %cst_13 : f32 to vector<8x1xf32>
    %16 = arith.divf %14, %15 : vector<8x1xf32>
    %17 = vector.broadcast %16 : vector<8x1xf32> to vector<8x256xf32>
    %18 = arith.subf %1, %17 : vector<8x256xf32>
    %19 = vector.broadcast %16 : vector<8x1xf32> to vector<8x256xf32>
    %20 = arith.subf %1, %19 : vector<8x256xf32>
    %21 = arith.mulf %18, %20 : vector<8x256xf32>
    %cst_14 = arith.constant dense<0.000000e+00> : vector<8xf32>
    %22 = vector.multi_reduction <add>, %21, %cst_14 [1] : vector<8x256xf32> to vector<8xf32>
    %23 = vector.shape_cast %22 : vector<8xf32> to vector<8x1xf32>
    %cst_15 = arith.constant 2.560000e+02 : f32
    %24 = vector.broadcast %cst_15 : f32 to vector<8x1xf32>
    %25 = arith.divf %23, %24 : vector<8x1xf32>
    %26 = vector.broadcast %16 : vector<8x1xf32> to vector<8x256xf32>
    %27 = arith.subf %1, %26 : vector<8x256xf32>
    %cst_16 = arith.constant 9.99999974E-6 : f32
    %28 = vector.broadcast %cst_16 : f32 to vector<8x1xf32>
    %29 = arith.addf %25, %28 : vector<8x1xf32>
    %30 = math.rsqrt %29 : vector<8x1xf32>
    %31 = vector.broadcast %30 : vector<8x1xf32> to vector<8x256xf32>
    %32 = arith.mulf %27, %31 : vector<8x256xf32>
    %cst_17 = arith.constant 0.000000e+00 : f32
    %33 = vector.broadcast %cst_17 : f32 to vector<8x256xf32>
    %34 = arith.maximumf %32, %33 : vector<8x256xf32>
    %35 = tpu.concatenate %34, %3 in 0 : vector<8x256xf32>, vector<8x256xf32> -> vector<16x256xf32>
    %36 = vector.extract_strided_slice %4 {offsets = [0, 0], sizes = [8, 16], strides = [1, 1]} : vector<16x16xf32> to vector<8x16xf32>
    %cst_18 = arith.constant dense<0.000000e+00> : vector<8x256xf32>
    %37 = tpu.matmul %36, %35, %cst_18 {dimension_numbers = #tpu.dot_dimension_numbers<[1], [0], [0], [1], [0, 0, 1, 1], [], []>} : vector<8x16xf32>, vector<16x256xf32>, vector<8x256xf32> -> vector<8x256xf32>
    %38 = vector.broadcast %10 : vector<8x1xf32> to vector<8x256xf32>
    %39 = arith.addf %37, %38 : vector<8x256xf32>
    %cst_19 = arith.constant 0.000000e+00 : f32
    %40 = vector.broadcast %cst_19 : f32 to vector<8x256xf32>
    %41 = arith.subf %40, %39 : vector<8x256xf32>
    %42 = math.exp %41 : vector<8x256xf32>
    %cst_20 = arith.constant 1.000000e+00 : f32
    %43 = vector.broadcast %cst_20 : f32 to vector<8x256xf32>
    %44 = arith.addf %43, %42 : vector<8x256xf32>
    %45 = tpu.reciprocal %44 : vector<8x256xf32> -> vector<8x256xf32>
    %c0_21 = arith.constant 0 : index
    %c0_22 = arith.constant 0 : index
    %c0_23 = arith.constant 0 : index
    %46 = vector.load %arg8[%c0_21, %c0_22, %c0_23] : memref<1x8x256xf32, #tpu.memory_space<vmem>>, vector<1x8x256xf32>
    %47 = vector.shape_cast %46 : vector<1x8x256xf32> to vector<8x256xf32>
    %48 = vector.shape_cast %45 : vector<8x256xf32> to vector<1x8x256xf32>
    tpu.vector_store %arg8[%c0_21, %c0_22, %c0_23], %48 {strides = array<i32>} : memref<1x8x256xf32, #tpu.memory_space<vmem>>, vector<1x8x256xf32>,
    %cst_24 = arith.constant 0.000000e+00 : f32
    %49 = vector.broadcast %cst_24 : f32 to vector<8x256xf32>
    %50 = arith.maximumf %39, %49 : vector<8x256xf32>
    %51 = vector.extract_strided_slice %6 {offsets = [0, 0], sizes = [24, 8], strides = [1, 1]} : vector<32x8xf32> to vector<24x8xf32>
    %52 = vector.extract_strided_slice %6 {offsets = [24, 0], sizes = [8, 8], strides = [1, 1]} : vector<32x8xf32> to vector<8x8xf32>
    %cst_25 = arith.constant dense<0.000000e+00> : vector<24x256xf32>
    %53 = tpu.matmul %51, %50, %cst_25 {dimension_numbers = #tpu.dot_dimension_numbers<[1], [0], [0], [1], [0, 0, 1, 1], [], []>} : vector<24x8xf32>, vector<8x256xf32>, vector<24x256xf32> -> vector<24x256xf32>
    %54 = vector.broadcast %8 : vector<24x1xf32> to vector<24x256xf32>
    %55 = arith.addf %53, %54 : vector<24x256xf32>
    %56 = vector.extract_strided_slice %55 {offsets = [0, 0], sizes = [8, 256], strides = [1, 1]} : vector<24x256xf32> to vector<8x256xf32>
    %57 = vector.extract_strided_slice %55 {offsets = [8, 0], sizes = [8, 256], strides = [1, 1]} : vector<24x256xf32> to vector<8x256xf32>
    %58 = vector.extract_strided_slice %55 {offsets = [16, 0], sizes = [8, 256], strides = [1, 1]} : vector<24x256xf32> to vector<8x256xf32>
    %cst_26 = arith.constant dense<0.000000e+00> : vector<256x256xf32>
    %59 = tpu.matmul %57, %56, %cst_26 {dimension_numbers = #tpu.dot_dimension_numbers<[0], [0], [1], [1], [0, 1, 1, 1], [], []>} : vector<8x256xf32>, vector<8x256xf32>, vector<256x256xf32> -> vector<256x256xf32>
    %cst_27 = arith.constant dense<0xFF800000> : vector<256xf32>
    %60 = vector.multi_reduction <maximumf>, %59, %cst_27 [0] : vector<256x256xf32> to vector<256xf32>
    %61 = vector.shape_cast %60 : vector<256xf32> to vector<1x256xf32>
    %62 = vector.broadcast %61 : vector<1x256xf32> to vector<256x256xf32>
    %63 = arith.subf %59, %62 : vector<256x256xf32>
    %64 = math.exp %63 : vector<256x256xf32>
    %cst_28 = arith.constant dense<0.000000e+00> : vector<256xf32>
    %65 = vector.multi_reduction <add>, %64, %cst_28 [0] : vector<256x256xf32> to vector<256xf32>
    %66 = vector.shape_cast %65 : vector<256xf32> to vector<1x256xf32>
    %cst_29 = arith.constant dense<0.000000e+00> : vector<8x256xf32>
    %67 = tpu.matmul %58, %64, %cst_29 {dimension_numbers = #tpu.dot_dimension_numbers<[1], [0], [0], [1], [0, 0, 1, 1], [], []>} : vector<8x256xf32>, vector<256x256xf32>, vector<8x256xf32> -> vector<8x256xf32>
    %68 = vector.broadcast %66 : vector<1x256xf32> to vector<8x256xf32>
    %69 = arith.divf %67, %68 : vector<8x256xf32>
    %cst_30 = arith.constant dense<0.000000e+00> : vector<8x256xf32>
    %70 = tpu.matmul %52, %69, %cst_30 {dimension_numbers = #tpu.dot_dimension_numbers<[1], [0], [0], [1], [0, 0, 1, 1], [], []>} : vector<8x8xf32>, vector<8x256xf32>, vector<8x256xf32> -> vector<8x256xf32>
    %71 = vector.broadcast %9 : vector<8x1xf32> to vector<8x256xf32>
    %72 = arith.addf %70, %71 : vector<8x256xf32>
    %73 = tpu.concatenate %50, %72 in 0 : vector<8x256xf32>, vector<8x256xf32> -> vector<16x256xf32>
    %74 = vector.extract_strided_slice %4 {offsets = [8, 0], sizes = [8, 16], strides = [1, 1]} : vector<16x16xf32> to vector<8x16xf32>
    %cst_31 = arith.constant dense<0.000000e+00> : vector<8x256xf32>
    %75 = tpu.matmul %74, %73, %cst_31 {dimension_numbers = #tpu.dot_dimension_numbers<[1], [0], [0], [1], [0, 0, 1, 1], [], []>} : vector<8x16xf32>, vector<16x256xf32>, vector<8x256xf32> -> vector<8x256xf32>
    %76 = vector.broadcast %11 : vector<8x1xf32> to vector<8x256xf32>
    %77 = arith.addf %75, %76 : vector<8x256xf32>
    %cst_32 = arith.constant dense<0.000000e+00> : vector<8xf32>
    %78 = vector.multi_reduction <add>, %77, %cst_32 [1] : vector<8x256xf32> to vector<8xf32>
    %79 = vector.shape_cast %78 : vector<8xf32> to vector<8x1xf32>
    %cst_33 = arith.constant 2.560000e+02 : f32
    %80 = vector.broadcast %cst_33 : f32 to vector<8x1xf32>
    %81 = arith.divf %79, %80 : vector<8x1xf32>
    %82 = vector.broadcast %81 : vector<8x1xf32> to vector<8x256xf32>
    %83 = arith.subf %77, %82 : vector<8x256xf32>
    %84 = vector.broadcast %81 : vector<8x1xf32> to vector<8x256xf32>
    %85 = arith.subf %77, %84 : vector<8x256xf32>
    %86 = arith.mulf %83, %85 : vector<8x256xf32>
    %cst_34 = arith.constant dense<0.000000e+00> : vector<8xf32>
    %87 = vector.multi_reduction <add>, %86, %cst_34 [1] : vector<8x256xf32> to vector<8xf32>
    %88 = vector.shape_cast %87 : vector<8xf32> to vector<8x1xf32>
    %cst_35 = arith.constant 2.560000e+02 : f32
    %89 = vector.broadcast %cst_35 : f32 to vector<8x1xf32>
    %90 = arith.divf %88, %89 : vector<8x1xf32>
    %91 = vector.broadcast %81 : vector<8x1xf32> to vector<8x256xf32>
    %92 = arith.subf %77, %91 : vector<8x256xf32>
    %cst_36 = arith.constant 9.99999974E-6 : f32
    %93 = vector.broadcast %cst_36 : f32 to vector<8x1xf32>
    %94 = arith.addf %90, %93 : vector<8x1xf32>
    %95 = math.rsqrt %94 : vector<8x1xf32>
    %96 = vector.broadcast %95 : vector<8x1xf32> to vector<8x256xf32>
    %97 = arith.mulf %92, %96 : vector<8x256xf32>
    %cst_37 = arith.constant 0.000000e+00 : f32
    %98 = vector.broadcast %cst_37 : f32 to vector<8x256xf32>
    %99 = arith.maximumf %97, %98 : vector<8x256xf32>
    %c0_38 = arith.constant 0 : index
    %c0_39 = arith.constant 0 : index
    %c0_40 = arith.constant 0 : index
    %100 = vector.load %arg7[%c0_38, %c0_39, %c0_40] : memref<1x8x256xf32, #tpu.memory_space<vmem>>, vector<1x8x256xf32>
    %101 = vector.shape_cast %100 : vector<1x8x256xf32> to vector<8x256xf32>
    %102 = vector.shape_cast %99 : vector<8x256xf32> to vector<1x8x256xf32>
    tpu.vector_store %arg7[%c0_38, %c0_39, %c0_40], %102 {strides = array<i32>} : memref<1x8x256xf32, #tpu.memory_space<vmem>>, vector<1x8x256xf32>,
    %cst_41 = arith.constant dense<0.000000e+00> : vector<1x256xf32>
    %103 = tpu.matmul %5, %99, %cst_41 {dimension_numbers = #tpu.dot_dimension_numbers<[1], [0], [0], [1], [0, 0, 1, 1], [], []>} : vector<1x8xf32>, vector<8x256xf32>, vector<1x256xf32> -> vector<1x256xf32>
    %104 = vector.broadcast %12 : vector<1x1xf32> to vector<1x256xf32>
    %105 = arith.addf %103, %104 : vector<1x256xf32>
    %cst_42 = arith.constant 0.000000e+00 : f32
    %106 = vector.broadcast %cst_42 : f32 to vector<1x256xf32>
    %107 = arith.subf %106, %105 : vector<1x256xf32>
    %108 = math.exp %107 : vector<1x256xf32>
    %cst_43 = arith.constant 1.000000e+00 : f32
    %109 = vector.broadcast %cst_43 : f32 to vector<1x256xf32>
    %110 = arith.addf %109, %108 : vector<1x256xf32>
    %111 = tpu.reciprocal %110 : vector<1x256xf32> -> vector<1x256xf32>
    %c0_44 = arith.constant 0 : index
    %c0_45 = arith.constant 0 : index
    %c0_46 = arith.constant 0 : index
    %112 = vector.load %arg9[%c0_44, %c0_45, %c0_46] : memref<1x1x256xf32, #tpu.memory_space<vmem>>, vector<1x1x256xf32>
    %113 = vector.shape_cast %112 : vector<1x1x256xf32> to vector<1x256xf32>
    %114 = vector.shape_cast %111 : vector<1x256xf32> to vector<1x1x256xf32>
    tpu.vector_store %arg9[%c0_44, %c0_45, %c0_46], %114 {strides = array<i32>} : memref<1x1x256xf32, #tpu.memory_space<vmem>>, vector<1x1x256xf32>,
    return
  }
  func.func @transform_0(%arg0: i32) -> (i32, i32, i32) {
    %c0_i32 = arith.constant 0 : i32
    %c0_i32_0 = arith.constant 0 : i32
    %c0_i32_1 = arith.constant 0 : i32
    return %arg0, %c0_i32, %c0_i32_0 : i32, i32, i32
  }
  func.func @transform_1(%arg0: i32) -> (i32, i32, i32) {
    %c0_i32 = arith.constant 0 : i32
    %c0_i32_0 = arith.constant 0 : i32
    %c0_i32_1 = arith.constant 0 : i32
    return %arg0, %c0_i32, %c0_i32_0 : i32, i32, i32
  }
  func.func @transform_2(%arg0: i32) -> (i32, i32) {
    %c0_i32 = arith.constant 0 : i32
    %c0_i32_0 = arith.constant 0 : i32
    %c0_i32_1 = arith.constant 0 : i32
    return %c0_i32, %c0_i32_0 : i32, i32
  }
  func.func @transform_3(%arg0: i32) -> (i32, i32) {
    %c0_i32 = arith.constant 0 : i32
    %c0_i32_0 = arith.constant 0 : i32
    %c0_i32_1 = arith.constant 0 : i32
    return %c0_i32, %c0_i32_0 : i32, i32
  }
  func.func @transform_4(%arg0: i32) -> (i32, i32) {
    %c0_i32 = arith.constant 0 : i32
    %c0_i32_0 = arith.constant 0 : i32
    %c0_i32_1 = arith.constant 0 : i32
    return %c0_i32, %c0_i32_0 : i32, i32
  }
  func.func @transform_5(%arg0: i32) -> (i32, i32) {
    %c0_i32 = arith.constant 0 : i32
    %c0_i32_0 = arith.constant 0 : i32
    %c0_i32_1 = arith.constant 0 : i32
    return %c0_i32, %c0_i32_0 : i32, i32
  }
  func.func @transform_6(%arg0: i32) -> (i32, i32, i32) {
    %c0_i32 = arith.constant 0 : i32
    %c0_i32_0 = arith.constant 0 : i32
    %c0_i32_1 = arith.constant 0 : i32
    return %arg0, %c0_i32, %c0_i32_0 : i32, i32, i32
  }
  func.func @transform_7(%arg0: i32) -> (i32, i32, i32) {
    %c0_i32 = arith.constant 0 : i32
    %c0_i32_0 = arith.constant 0 : i32
    %c0_i32_1 = arith.constant 0 : i32
    return %arg0, %c0_i32, %c0_i32_0 : i32, i32, i32
  }
  func.func @transform_8(%arg0: i32) -> (i32, i32, i32) {
    %c0_i32 = arith.constant 0 : i32
    %c0_i32_0 = arith.constant 0 : i32
    %c0_i32_1 = arith.constant 0 : i32
    return %arg0, %c0_i32, %c0_i32_0 : i32, i32, i32
  }
}

</mosaic_0001>

<llo_original>
// kernel: tpu_custom_call.1
$region0: #{tpu_custom_call.1}
  #allocation0 [shape = 'u32[]', space=smem, size = 0x4, offset = 0x4, fixed_abs, tag = 'smem constant byte address 0x4 - core index']
  #allocation1 [shape = 'u32[144,128]{1,0:T(1,128)}', space=vmem, size = 0x12000, scoped, tag = 'internal scratch']
  %s0 = inlined_call_operand.vmem [shape: f32[2,8,256], index: 0, kind: input, shape index: {}]
  %s1 = inlined_call_operand.vmem [shape: f32[2,8,256], index: 1, kind: input, shape index: {}]
  %s2 = inlined_call_operand.vmem [shape: f32[16,16], index: 2, kind: input, shape index: {}]
  %s3 = inlined_call_operand.vmem [shape: f32[1,8], index: 3, kind: input, shape index: {}]
  %s4 = inlined_call_operand.vmem [shape: f32[32,8], index: 4, kind: input, shape index: {}]
  %s5 = inlined_call_operand.vmem [shape: f32[49,1], index: 5, kind: input, shape index: {}]
  %s6 = inlined_call_operand.hbm [shape: f32[2,8,256], index: 6, kind: output, shape index: {0}]
  %s7 = inlined_call_operand.hbm [shape: f32[2,8,256], index: 7, kind: output, shape index: {1}]
  %s8 = inlined_call_operand.hbm [shape: f32[2,1,256], index: 8, kind: output, shape index: {2}]
  %9 = xla_tuple %s6, %s7, %s8
  %s10 = sld [smem:[#allocation0]]
  $region73: #{tpu_custom_call.1} parent=0
    _
  %s12 = ssub.s32 1, %s10
  %s13 = scalar_select 0, %s12, %s10
  $region1: #{tpu_custom_call.1} parent=0
    #allocation2 [shape = 'u8[16384]{0}', space=vmem, size = 0x4000, scoped, tag = 'output window, operand 0']
    #allocation3 [shape = 's32[2]{0}', space=sflag, size = 0x8, scoped, tag = 'scoped memory for tpu_custom_call.1']
    #allocation4 [shape = 'u8[16384]{0}', space=vmem, size = 0x4000, scoped, tag = 'output window, operand 1']
    #allocation5 [shape = 's32[2]{0}', space=sflag, size = 0x8, scoped, tag = 'scoped memory for tpu_custom_call.1']
    #allocation6 [shape = 'u8[2048]{0}', space=vmem, size = 0x800, scoped, tag = 'output window, operand 2']
    %14 = vsyncpa [#allocation3], 0
    %s15 = scalar_lea.sflag [#allocation3], 1
    %16 = vsyncpa %s15, 0
    %17 = vsyncpa [#allocation5], 0
    %s18 = scalar_lea.sflag [#allocation5], 1
    %19 = vsyncpa %s18, 0
    loop: start=0, step=1, limit=4
    $region2: #{tpu_custom_call.1} parent=1 // loop_pre_header
      _
    $region3: #{tpu_custom_call.1} parent=1 // loop_header
      %s21 = sphi 0, %s25
      %p22 = scmp.ge.s32.totalorder %s21, 4
      %s31 = sphi 0, %s33
      %s34 = sphi 0, %s31
      %s35 = sphi 0, %s34
      %s51 = sphi 0, %s35
      %s57 = sphi 0, %s59
      %s60 = sphi 0, %s57
      %s61 = sphi 0, %s60
      %s77 = sphi 0, %s61
      %s81 = sphi 0, %s81
      %s83 = sphi 0, %s81
      %s84 = sphi 0, %s83
      %s98 = sphi 0, %s84
      %s102 = sphi 0, %s102
      %s104 = sphi 0, %s102
      %s105 = sphi 0, %s104
      %s119 = sphi 0, %s105
      %s123 = sphi 0, %s123
      %s125 = sphi 0, %s123
      %s126 = sphi 0, %s125
      %s140 = sphi 0, %s126
      %s144 = sphi 0, %s144
      %s146 = sphi 0, %s144
      %s147 = sphi 0, %s146
      %s161 = sphi 0, %s147
      %s167 = sphi 0, %s169
      %s170 = sphi 0, %s167
      %s171 = sphi 0, %s170
      %s187 = sphi 0, %s171
      %s193 = sphi 0, %s195
      %s196 = sphi 0, %s193
      %s197 = sphi 0, %s196
      %s213 = sphi 0, %s197
      %s219 = sphi 0, %s221
      %s222 = sphi 0, %s219
      %s223 = sphi 0, %s222
      %s239 = sphi 0, %s223
    $region4: #{tpu_custom_call.1} parent=1 // loop_header_branch
      %24 = sbr.rel (%p22) target = $region8
    $region5: #{tpu_custom_call.1} parent=1 // loop_body
      %s26 = ssub.s32 %s21, 1
      %s27 = ssub.s32 %s21, 2
      %s28 = sadd.s32 %s21, 1
      %s29 = ssub.s32 %s21, %s28
      %p30 = scmp.eq.s32.totalorder %s29, 0
      %s32 = sadd.s32 %s31, 1
      %s33 = scalar_select %p30, %s31, %s32
      %p36 = pneg %p30
      %p37 = scmp.eq.s32.totalorder %s21, 1
      %p38 = por %p36, %p37
      %p39 = scmp.ne.s32.totalorder %s31, %s34
      %p40 = scmp.eq.s32.totalorder %s21, 0
      %p41 = por %p39, %p40
      %p42 = scmp.ne.s32.totalorder %s31, %s34
      %p43 = scmp.eq.s32.totalorder %s26, 1
      %p44 = por %p42, %p43
      %p45 = scmp.ne.s32.totalorder %s34, %s35
      %p46 = scmp.eq.s32.totalorder %s26, 0
      %p47 = por %p45, %p46
      %p48 = scmp.ne.s32.totalorder %s34, %s35
      %p49 = scmp.eq.s32.totalorder %s27, 1
      %p50 = por %p48, %p49
      %p52 = scmp.ne.s32.totalorder %s35, %s51
      %p53 = scmp.eq.s32.totalorder %s27, 0
      %p54 = por %p52, %p53
      %s55 = ssub.s32 %s21, %s28
      %p56 = scmp.eq.s32.totalorder %s55, 0
      %s58 = sadd.s32 %s57, 1
      %s59 = scalar_select %p56, %s57, %s58
      %p62 = pneg %p56
      %p63 = scmp.eq.s32.totalorder %s21, 1
      %p64 = por %p62, %p63
      %p65 = scmp.ne.s32.totalorder %s57, %s60
      %p66 = scmp.eq.s32.totalorder %s21, 0
      %p67 = por %p65, %p66
      %p68 = scmp.ne.s32.totalorder %s57, %s60
      %p69 = scmp.eq.s32.totalorder %s26, 1
      %p70 = por %p68, %p69
      %p71 = scmp.ne.s32.totalorder %s60, %s61
      %p72 = scmp.eq.s32.totalorder %s26, 0
      %p73 = por %p71, %p72
      %p74 = scmp.ne.s32.totalorder %s60, %s61
      %p75 = scmp.eq.s32.totalorder %s27, 1
      %p76 = por %p74, %p75
      %p78 = scmp.ne.s32.totalorder %s61, %s77
      %p79 = scmp.eq.s32.totalorder %s27, 0
      %p80 = por %p78, %p79
      %s82 = sadd.s32 %s81, 1
      %p85 = scmp.eq.s32.totalorder %s21, 1
      %p86 = scmp.ne.s32.totalorder %s81, %s83
      %p87 = scmp.eq.s32.totalorder %s21, 0
      %p88 = por %p86, %p87
      %p89 = scmp.ne.s32.totalorder %s81, %s83
      %p90 = scmp.eq.s32.totalorder %s26, 1
      %p91 = por %p89, %p90
      %p92 = scmp.ne.s32.totalorder %s83, %s84
      %p93 = scmp.eq.s32.totalorder %s26, 0
      %p94 = por %p92, %p93
      %p95 = scmp.ne.s32.totalorder %s83, %s84
      %p96 = scmp.eq.s32.totalorder %s27, 1
      %p97 = por %p95, %p96
      %p99 = scmp.ne.s32.totalorder %s84, %s98
      %p100 = scmp.eq.s32.totalorder %s27, 0
      %p101 = por %p99, %p100
      %s103 = sadd.s32 %s102, 1
      %p106 = scmp.eq.s32.totalorder %s21, 1
      %p107 = scmp.ne.s32.totalorder %s102, %s104
      %p108 = scmp.eq.s32.totalorder %s21, 0
      %p109 = por %p107, %p108
      %p110 = scmp.ne.s32.totalorder %s102, %s104
      %p111 = scmp.eq.s32.totalorder %s26, 1
      %p112 = por %p110, %p111
      %p113 = scmp.ne.s32.totalorder %s104, %s105
      %p114 = scmp.eq.s32.totalorder %s26, 0
      %p115 = por %p113, %p114
      %p116 = scmp.ne.s32.totalorder %s104, %s105
      %p117 = scmp.eq.s32.totalorder %s27, 1
      %p118 = por %p116, %p117
      %p120 = scmp.ne.s32.totalorder %s105, %s119
      %p121 = scmp.eq.s32.totalorder %s27, 0
      %p122 = por %p120, %p121
      %s124 = sadd.s32 %s123, 1
      %p127 = scmp.eq.s32.totalorder %s21, 1
      %p128 = scmp.ne.s32.totalorder %s123, %s125
      %p129 = scmp.eq.s32.totalorder %s21, 0
      %p130 = por %p128, %p129
      %p131 = scmp.ne.s32.totalorder %s123, %s125
      %p132 = scmp.eq.s32.totalorder %s26, 1
      %p133 = por %p131, %p132
      %p134 = scmp.ne.s32.totalorder %s125, %s126
      %p135 = scmp.eq.s32.totalorder %s26, 0
      %p136 = por %p134, %p135
      %p137 = scmp.ne.s32.totalorder %s125, %s126
      %p138 = scmp.eq.s32.totalorder %s27, 1
      %p139 = por %p137, %p138
      %p141 = scmp.ne.s32.totalorder %s126, %s140
      %p142 = scmp.eq.s32.totalorder %s27, 0
      %p143 = por %p141, %p142
      %s145 = sadd.s32 %s144, 1
      %p148 = scmp.eq.s32.totalorder %s21, 1
      %p149 = scmp.ne.s32.totalorder %s144, %s146
      %p150 = scmp.eq.s32.totalorder %s21, 0
      %p151 = por %p149, %p150
      %p152 = scmp.ne.s32.totalorder %s144, %s146
      %p153 = scmp.eq.s32.totalorder %s26, 1
      %p154 = por %p152, %p153
      %p155 = scmp.ne.s32.totalorder %s146, %s147
      %p156 = scmp.eq.s32.totalorder %s26, 0
      %p157 = por %p155, %p156
      %p158 = scmp.ne.s32.totalorder %s146, %s147
      %p159 = scmp.eq.s32.totalorder %s27, 1
      %p160 = por %p158, %p159
      %p162 = scmp.ne.s32.totalorder %s147, %s161
      %p163 = scmp.eq.s32.totalorder %s27, 0
      %p164 = por %p162, %p163
      %s165 = ssub.s32 %s21, %s28
      %p166 = scmp.eq.s32.totalorder %s165, 0
      %s168 = sadd.s32 %s167, 1
      %s169 = scalar_select %p166, %s167, %s168
      %p172 = pneg %p166
      %p173 = scmp.eq.s32.totalorder %s21, 1
      %p174 = por %p172, %p173
      %p175 = scmp.ne.s32.totalorder %s167, %s170
      %p176 = scmp.eq.s32.totalorder %s21, 0
      %p177 = por %p175, %p176
      %p178 = scmp.ne.s32.totalorder %s167, %s170
      %p179 = scmp.eq.s32.totalorder %s26, 1
      %p180 = por %p178, %p179
      %p181 = scmp.ne.s32.totalorder %s170, %s171
      %p182 = scmp.eq.s32.totalorder %s26, 0
      %p183 = por %p181, %p182
      %p184 = scmp.ne.s32.totalorder %s170, %s171
      %p185 = scmp.eq.s32.totalorder %s27, 1
      %p186 = por %p184, %p185
      %p188 = scmp.ne.s32.totalorder %s171, %s187
      %p189 = scmp.eq.s32.totalorder %s27, 0
      %p190 = por %p188, %p189
      %s191 = ssub.s32 %s21, %s28
      %p192 = scmp.eq.s32.totalorder %s191, 0
      %s194 = sadd.s32 %s193, 1
      %s195 = scalar_select %p192, %s193, %s194
      %p198 = pneg %p192
      %p199 = scmp.eq.s32.totalorder %s21, 1
      %p200 = por %p198, %p199
      %p201 = scmp.ne.s32.totalorder %s193, %s196
      %p202 = scmp.eq.s32.totalorder %s21, 0
      %p203 = por %p201, %p202
      %p204 = scmp.ne.s32.totalorder %s193, %s196
      %p205 = scmp.eq.s32.totalorder %s26, 1
      %p206 = por %p204, %p205
      %p207 = scmp.ne.s32.totalorder %s196, %s197
      %p208 = scmp.eq.s32.totalorder %s26, 0
      %p209 = por %p207, %p208
      %p210 = scmp.ne.s32.totalorder %s196, %s197
      %p211 = scmp.eq.s32.totalorder %s27, 1
      %p212 = por %p210, %p211
      %p214 = scmp.ne.s32.totalorder %s197, %s213
      %p215 = scmp.eq.s32.totalorder %s27, 0
      %p216 = por %p214, %p215
      %s217 = ssub.s32 %s21, %s28
      %p218 = scmp.eq.s32.totalorder %s217, 0
      %s220 = sadd.s32 %s219, 1
      %s221 = scalar_select %p218, %s219, %s220
      %p224 = pneg %p218
      %p225 = scmp.eq.s32.totalorder %s21, 1
      %p226 = por %p224, %p225
      %p227 = scmp.ne.s32.totalorder %s219, %s222
      %p228 = scmp.eq.s32.totalorder %s21, 0
      %p229 = por %p227, %p228
      %p230 = scmp.ne.s32.totalorder %s219, %s222
      %p231 = scmp.eq.s32.totalorder %s26, 1
      %p232 = por %p230, %p231
      %p233 = scmp.ne.s32.totalorder %s222, %s223
      %p234 = scmp.eq.s32.totalorder %s26, 0
      %p235 = por %p233, %p234
      %p236 = scmp.ne.s32.totalorder %s222, %s223
      %p237 = scmp.eq.s32.totalorder %s27, 1
      %p238 = por %p236, %p237
      %p240 = scmp.ne.s32.totalorder %s223, %s239
      %p241 = scmp.eq.s32.totalorder %s27, 0
      %p242 = por %p240, %p241
      %p243 = scmp.le.s32.totalorder 1, %s21
      %p244 = scmp.lt.s32.totalorder %s21, 3
      %p245 = pnand %p243, %p244
      %p246 = pneg %p245
      // Predicated region
      $region9: #{tpu_custom_call.1} parent=5 // pred_check
        _
      $region10: #{tpu_custom_call.1} parent=5 // pred_check_branch
        %248 = sbr.rel (%p245) target = $region12
      $region11: #{tpu_custom_call.1} parent=5 // pred_region
        %s249 = ssub.s32 %s21, 1
        // Predicated region
        $region13: #{tpu_custom_call.1} parent=11 // pred_check
          %p250 = pneg %p94
        $region14: #{tpu_custom_call.1} parent=11 // pred_check_branch
          %252 = sbr.rel (%p250) target = $region16
        $region15: #{tpu_custom_call.1} parent=11 // pred_region
          _
        $region16: #{tpu_custom_call.1} parent=11 // pred_fallthru
          _
        // Predicated region
        $region17: #{tpu_custom_call.1} parent=11 // pred_check
          %p253 = pneg %p115
        $region18: #{tpu_custom_call.1} parent=11 // pred_check_branch
          %255 = sbr.rel (%p253) target = $region20
        $region19: #{tpu_custom_call.1} parent=11 // pred_region
          _
        $region20: #{tpu_custom_call.1} parent=11 // pred_fallthru
          _
        // Predicated region
        $region21: #{tpu_custom_call.1} parent=11 // pred_check
          %p256 = pneg %p136
        $region22: #{tpu_custom_call.1} parent=11 // pred_check_branch
          %258 = sbr.rel (%p256) target = $region24
        $region23: #{tpu_custom_call.1} parent=11 // pred_region
          _
        $region24: #{tpu_custom_call.1} parent=11 // pred_fallthru
          _
        // Predicated region
        $region25: #{tpu_custom_call.1} parent=11 // pred_check
          %p259 = pneg %p157
        $region26: #{tpu_custom_call.1} parent=11 // pred_check_branch
          %261 = sbr.rel (%p259) target = $region28
        $region27: #{tpu_custom_call.1} parent=11 // pred_region
          _
        $region28: #{tpu_custom_call.1} parent=11 // pred_fallthru
          _
      $region12: #{tpu_custom_call.1} parent=5 // pred_fallthru
        _
      %p262 = scmp.lt.s32.totalorder %s21, 2
      // Predicated region
      $region29: #{tpu_custom_call.1} parent=5 // pred_check
        %p263 = pneg %p262
      $region30: #{tpu_custom_call.1} parent=5 // pred_check_branch
        %265 = sbr.rel (%p263) target = $region32
      $region31: #{tpu_custom_call.1} parent=5 // pred_region
        // Predicated region
        $region33: #{tpu_custom_call.1} parent=31 // pred_check
          %p266 = pneg %p41
        $region34: #{tpu_custom_call.1} parent=31 // pred_check_branch
          %268 = sbr.rel (%p266) target = $region36
        $region35: #{tpu_custom_call.1} parent=31 // pred_region
          %p269 = scmp.lt.s32.totalorder %s21, 1
          %s270 = scalar_select %p269, %s21, 1
          %s271 = smul.addr %s270, 2
          %s272 = smul.addr %s271, 8
          %s273 = scalar_lea.vmem %s0, %s272
        $region36: #{tpu_custom_call.1} parent=31 // pred_fallthru
          _
        // Predicated region
        $region37: #{tpu_custom_call.1} parent=31 // pred_check
          %p274 = pneg %p67
        $region38: #{tpu_custom_call.1} parent=31 // pred_check_branch
          %276 = sbr.rel (%p274) target = $region40
        $region39: #{tpu_custom_call.1} parent=31 // pred_region
          %p277 = scmp.lt.s32.totalorder %s21, 1
          %s278 = scalar_select %p277, %s21, 1
          %s279 = smul.addr %s278, 2
          %s280 = smul.addr %s279, 8
          %s281 = scalar_lea.vmem %s1, %s280
        $region40: #{tpu_custom_call.1} parent=31 // pred_fallthru
          _
      $region32: #{tpu_custom_call.1} parent=5 // pred_fallthru
        _
      %p282 = scmp.le.s32.totalorder 1, %s21
      %p283 = scmp.lt.s32.totalorder %s21, 3
      %p284 = pnand %p282, %p283
      %p285 = pneg %p284
      // Predicated region
      $region41: #{tpu_custom_call.1} parent=5 // pred_check
        _
      $region42: #{tpu_custom_call.1} parent=5 // pred_check_branch
        %287 = sbr.rel (%p284) target = $region44
      $region43: #{tpu_custom_call.1} parent=5 // pred_region
        %s288 = ssub.s32 %s21, 1
        %p289 = scmp.lt.s32.totalorder %s26, 1
        %s290 = scalar_select %p289, %s26, 1
        %s291 = smul.addr %s290, 2
        %s292 = smul.addr %s291, 8
        %s293 = scalar_lea.vmem %s0, %s292
        %p294 = pneg %p47
        %p295 = pneg %p44
        %p296 = scmp.lt.s32.totalorder %s26, 1
        %s297 = scalar_select %p296, %s26, 1
        %s298 = smul.addr %s297, 2
        %s299 = smul.addr %s298, 8
        %s300 = scalar_lea.vmem %s1, %s299
        %p301 = pneg %p73
        %p302 = pneg %p70
        %p303 = pneg %p94
        %p304 = pneg %p91
        %p305 = pneg %p115
        %p306 = pneg %p112
        %p307 = pneg %p136
        %p308 = pneg %p133
        %p309 = pneg %p157
        %p310 = pneg %p154
        %p311 = pneg %p183
        %p312 = pneg %p180
        %s313 = sand.u32 %s170, 1
        %s314 = scalar_lea.sflag [#allocation3], %s313
        %s315 = sand.u32 %s170, 1
        %s316 = smul.addr %s315, 16
        %s317 = scalar_lea.vmem [#allocation2], %s316
        %p318 = pneg %p209
        %p319 = pneg %p206
        %s320 = sand.u32 %s26, 1
        %s321 = scalar_lea.sflag [#allocation5], %s320
        %s322 = sand.u32 %s196, 1
        %s323 = smul.addr %s322, 16
        %s324 = scalar_lea.vmem [#allocation4], %s323
        %p325 = pneg %p235
        %p326 = pneg %p232
        %s327 = sand.u32 %s26, 1
        %s328 = scalar_lea.sflag [#allocation5], %s327
        %s329 = sand.u32 %s222, 1
        %s330 = smul.addr %s329, 2
        %s331 = scalar_lea.vmem [#allocation6], %s330
        %p332 = scmp.lt.s32.totalorder %s26, 1
        %s333 = scalar_select %p332, %s26, 1
        %s334 = smul.addr %s333, 2
        %s335 = smul.addr %s334, 8
        %s336 = scalar_lea.vmem %s0, %s335
        %p337 = scmp.lt.s32.totalorder %s26, 1
        %s338 = scalar_select %p337, %s26, 1
        %s339 = smul.addr %s338, 2
        %s340 = smul.addr %s339, 8
        %s341 = scalar_lea.vmem %s1, %s340
        %v342 = vld [vmem:[%s336] sm:$0xff]
        %v343 = vld [vmem:[%s336 + $0x8] sm:$0xff]
        %v344 = vld [vmem:[%s341] sm:$0xff]
        %v345 = vld [vmem:[%s341 + $0x8] sm:$0xff]
        %v346 = vld [vmem:[%s2] sm:$0xff]
        %v347 = vld [vmem:[%s2 + $0x8] sm:$0xff]
        %v348 = vld [vmem:[%s3] sm:$0x1]
        %v349 = vld [vmem:[%s4] sm:$0xff]
        %v350 = vld [vmem:[%s4 + $0x8] sm:$0xff]
        %v351 = vld [vmem:[%s4 + $0x10] sm:$0xff]
        %v352 = vld [vmem:[%s4 + $0x18] sm:$0xff]
        %v353 = vld [vmem:[%s5] sm:$0xff]
        %v354 = vld [vmem:[%s5 + $0x8] sm:$0xff]
        %v355 = vld [vmem:[%s5 + $0x10] sm:$0xff]
        %v356 = vld [vmem:[%s5 + $0x18] sm:$0xff]
        %v357 = vld [vmem:[%s5 + $0x20] sm:$0xff]
        %v358 = vld [vmem:[%s5 + $0x28] sm:$0xff]
        %v359 = vld [vmem:[%s5 + $0x30] sm:$0x1]
        %v360 = vadd.f32 %v342, %v343
        %361 = vadd.xlane.f32.xlu0 %v360
        %v362 = vpop.xlane.xlu0 %361
        %v363 = vrcp.pop 256.0
        %v364 = vmul.f32 %v362, %v363
        %v365 = vsub.f32 %v342, %v364
        %v366 = vsub.f32 %v343, %v364
        %v367 = vmul.f32 %v365, %v365
        %v368 = vmul.f32 %v366, %v366
        %v369 = vadd.f32 %v367, %v368
        %370 = vadd.xlane.f32.xlu0 %v369
        %v371 = vpop.xlane.xlu0 %370
        %v372 = vmul.f32 %v371, %v363
        %v373 = vadd.f32 %v372, 1e-05
        %v374 = vrsqrt.pop %v373
        %v375 = vmul.f32 %v365, %v374
        %v376 = vmul.f32 %v366, %v374
        %v377 = vmax.f32 %v375, 0.0
        %v378 = vmax.f32 %v376, 0.0
        %380 = vset.pattern.permute.xlu0 0
        %381 = vperm.xlu0 %380, %v357
        %v382 = vpop.permute.xlu0 %381
        %vm384 = vcmask 130048
        %v386 = vsel %vm384, %v346, 0
        %388 = vmatprep.subr.mxu0 0.0
        %389 = vmatpush1.msra.mxu0 0.0
        %390 = vmatprep.subr.mxu0 0.0
        %391 = vmatpush1.msra.mxu0 0.0
        %392 = vmatprep.subr.mxu0 0.0
        %393 = vmatpush1.msra.mxu0 0.0
        %394 = vmatprep.subr.mxu0 0.0
        %395 = vmatpush1.msra.mxu0 0.0
        %396 = vmatprep.subr.mxu0 0.0
        %397 = vmatpush1.msra.mxu0 0.0
        %398 = vmatprep.subr.mxu0 0.0
        %399 = vmatpush1.msra.mxu0 0.0
        %400 = vmatprep.subr.mxu0 0.0
        %401 = vmatpush1.msra.mxu0 0.0
        %402 = vmatprep.subr.mxu0 0.0
        %403 = vmatpush1.msra.mxu0 0.0
        %404 = vmatprep.subr.mxu0 0.0
        %405 = vmatpush1.msra.mxu0 0.0
        %406 = vmatprep.subr.mxu0 0.0
        %407 = vmatpush1.msra.mxu0 0.0
        %408 = vmatprep.subr.mxu0 0.0
        %409 = vmatpush1.msra.mxu0 0.0
        %410 = vmatprep.subr.mxu0 0.0
        %411 = vmatpush1.msra.mxu0 0.0
        %412 = vmatprep.subr.mxu0 0.0
        %413 = vmatpush1.msra.mxu0 0.0
        %414 = vmatprep.subr.mxu0 0.0
        %415 = vmatpush1.msra.mxu0 0.0
        %416 = vmatprep.subr.mxu0 %v345
        %417 = vmatpush1.msra.mxu0 %v344
        %418 = vmatprep.subr.mxu0 %v378
        %419 = vmatpush1.msra.mxu0 %v377
        %420 = vmatprep.subr.mxu0 0.0
        %421 = vmatpush2.msra.mxu0 0.0
        %422 = vmatprep.subr.mxu0 0.0
        %423 = vmatpush2.msra.mxu0 0.0
        %424 = vmatprep.subr.mxu0 0.0
        %425 = vmatpush2.msra.mxu0 0.0
        %426 = vmatprep.subr.mxu0 0.0
        %427 = vmatpush2.msra.mxu0 0.0
        %428 = vmatprep.subr.mxu0 0.0
        %429 = vmatpush2.msra.mxu0 0.0
        %430 = vmatprep.subr.mxu0 0.0
        %431 = vmatpush2.msra.mxu0 0.0
        %432 = vmatprep.subr.mxu0 0.0
        %433 = vmatpush2.msra.mxu0 0.0
        %434 = vmatprep.subr.mxu0 0.0
        %435 = vmatpush2.msra.mxu0 0.0
        %436 = vmatprep.subr.mxu0 0.0
        %437 = vmatpush2.msra.mxu0 0.0
        %438 = vmatprep.subr.mxu0 0.0
        %439 = vmatpush2.msra.mxu0 0.0
        %440 = vmatprep.subr.mxu0 0.0
        %441 = vmatpush2.msra.mxu0 0.0
        %442 = vmatprep.subr.mxu0 0.0
        %443 = vmatpush2.msra.mxu0 0.0
        %444 = vmatprep.subr.mxu0 0.0
        %445 = vmatpush2.msra.mxu0 0.0
        %446 = vmatprep.subr.mxu0 0.0
        %447 = vmatpush2.msra.mxu0 0.0
        %448 = vmatprep.subr.mxu0 0.0
        %449 = vmatpush2.msra.mxu0 0.0
        %450 = vmatprep.subr.mxu0 0.0
        %451 = vmatpush2.msra.mxu0 0.0
        %452 = vmatprep.mubr.f32.mxu0 0.0
        %453 = vmatmul.mubr.f32.gmra.mxu0 %v386
        %v454 = vpop.f32.mrf.mxu0
        %v455 = vadd.f32 %v382, %v454
        %v456 = vpop.f32.mrf.mxu0
        %v457 = vadd.f32 %v382, %v456
        %458 = vdwg.mxu0
        %v459 = vsub.f32 0.0, %v455
        %v460 = vsub.f32 0.0, %v457
        %v461 = vmul.f32 %v459, 1.442695
        %v462 = vpow.pop %v461
        %v463 = vmul.f32 %v460, 1.442695
        %v464 = vpow.pop %v463
        %v465 = vadd.f32 %v462, 1.0
        %v466 = vadd.f32 %v464, 1.0
        %v467 = vrcp.pop %v465
        %v468 = vrcp.pop %v466
        %469 = vst [vmem:[%s324] sm:$0xff] %v467
        %470 = vst [vmem:[%s324 + $0x8] sm:$0xff] %v468
        %v471 = vmax.f32 %v455, 0.0
        %v472 = vmax.f32 %v457, 0.0
        %474 = vset.pattern.permute.xlu0 0
        %475 = vperm.xlu0 %474, %v353
        %v476 = vpop.permute.xlu0 %475
        %479 = vset.pattern.permute.xlu0 0
        %480 = vperm.xlu0 %479, %v354
        %v481 = vpop.permute.xlu0 %480
        %484 = vset.pattern.permute.xlu0 0
        %485 = vperm.xlu0 %484, %v355
        %v486 = vpop.permute.xlu0 %485
        %vm488 = vcmask 64512
        %v490 = vsel %vm488, %v349, 0
        %v493 = vsel %vm488, %v350, 0
        %v496 = vsel %vm488, %v351, 0
        %498 = vmatprep.subr.mxu0 0.0
        %499 = vmatpush1.msra.mxu0 0.0
        %500 = vmatprep.subr.mxu0 0.0
        %501 = vmatpush1.msra.mxu0 0.0
        %502 = vmatprep.subr.mxu0 0.0
        %503 = vmatpush1.msra.mxu0 0.0
        %504 = vmatprep.subr.mxu0 0.0
        %505 = vmatpush1.msra.mxu0 0.0
        %506 = vmatprep.subr.mxu0 0.0
        %507 = vmatpush1.msra.mxu0 0.0
        %508 = vmatprep.subr.mxu0 0.0
        %509 = vmatpush1.msra.mxu0 0.0
        %510 = vmatprep.subr.mxu0 0.0
        %511 = vmatpush1.msra.mxu0 0.0
        %512 = vmatprep.subr.mxu0 0.0
        %513 = vmatpush1.msra.mxu0 0.0
        %514 = vmatprep.subr.mxu0 0.0
        %515 = vmatpush1.msra.mxu0 0.0
        %516 = vmatprep.subr.mxu0 0.0
        %517 = vmatpush1.msra.mxu0 0.0
        %518 = vmatprep.subr.mxu0 0.0
        %519 = vmatpush1.msra.mxu0 0.0
        %520 = vmatprep.subr.mxu0 0.0
        %521 = vmatpush1.msra.mxu0 0.0
        %522 = vmatprep.subr.mxu0 0.0
        %523 = vmatpush1.msra.mxu0 0.0
        %524 = vmatprep.subr.mxu0 0.0
        %525 = vmatpush1.msra.mxu0 0.0
        %526 = vmatprep.subr.mxu0 0.0
        %527 = vmatpush1.msra.mxu0 0.0
        %528 = vmatprep.subr.mxu0 %v472
        %529 = vmatpush1.msra.mxu0 %v471
        %530 = vmatprep.subr.mxu0 0.0
        %531 = vmatpush2.msra.mxu0 0.0
        %532 = vmatprep.subr.mxu0 0.0
        %533 = vmatpush2.msra.mxu0 0.0
        %534 = vmatprep.subr.mxu0 0.0
        %535 = vmatpush2.msra.mxu0 0.0
        %536 = vmatprep.subr.mxu0 0.0
        %537 = vmatpush2.msra.mxu0 0.0
        %538 = vmatprep.subr.mxu0 0.0
        %539 = vmatpush2.msra.mxu0 0.0
        %540 = vmatprep.subr.mxu0 0.0
        %541 = vmatpush2.msra.mxu0 0.0
        %542 = vmatprep.subr.mxu0 0.0
        %543 = vmatpush2.msra.mxu0 0.0
        %544 = vmatprep.subr.mxu0 0.0
        %545 = vmatpush2.msra.mxu0 0.0
        %546 = vmatprep.subr.mxu0 0.0
        %547 = vmatpush2.msra.mxu0 0.0
        %548 = vmatprep.subr.mxu0 0.0
        %549 = vmatpush2.msra.mxu0 0.0
        %550 = vmatprep.subr.mxu0 0.0
        %551 = vmatpush2.msra.mxu0 0.0
        %552 = vmatprep.subr.mxu0 0.0
        %553 = vmatpush2.msra.mxu0 0.0
        %554 = vmatprep.subr.mxu0 0.0
        %555 = vmatpush2.msra.mxu0 0.0
        %556 = vmatprep.subr.mxu0 0.0
        %557 = vmatpush2.msra.mxu0 0.0
        %558 = vmatprep.subr.mxu0 0.0
        %559 = vmatpush2.msra.mxu0 0.0
        %560 = vmatprep.subr.mxu0 0.0
        %561 = vmatpush2.msra.mxu0 0.0
        %562 = vmatprep.mubr.f32.mxu0 0.0
        %563 = vmatmul.mubr.f32.gmra.mxu0 %v490
        %v564 = vpop.f32.mrf.mxu0
        %v565 = vadd.f32 %v476, %v564
        %v566 = vpop.f32.mrf.mxu0
        %v567 = vadd.f32 %v476, %v566
        %568 = vmatprep.mubr.f32.mxu0 0.0
        %569 = vmatmul.mubr.f32.gmra.mxu0 %v493
        %v570 = vpop.f32.mrf.mxu0
        %v571 = vadd.f32 %v481, %v570
        %v572 = vpop.f32.mrf.mxu0
        %v573 = vadd.f32 %v481, %v572
        %574 = vmatprep.mubr.f32.mxu0 0.0
        %575 = vmatmul.mubr.f32.gmra.mxu0 %v496
        %v576 = vpop.f32.mrf.mxu0
        %v577 = vadd.f32 %v486, %v576
        %v578 = vpop.f32.mrf.mxu0
        %v579 = vadd.f32 %v486, %v578
        %580 = vdwg.mxu0
        %581 = vxpose.xlu0.b32.start [1/16] %v571, 128
        %582 = vxpose.xlu0.b32.cont [2/16] 0.0, 128
        %583 = vxpose.xlu0.b32.cont [3/16] 0.0, 128
        %584 = vxpose.xlu0.b32.cont [4/16] 0.0, 128
        %585 = vxpose.xlu0.b32.cont [5/16] 0.0, 128
        %586 = vxpose.xlu0.b32.cont [6/16] 0.0, 128
        %587 = vxpose.xlu0.b32.cont [7/16] 0.0, 128
        %588 = vxpose.xlu0.b32.cont [8/16] 0.0, 128
        %589 = vxpose.xlu0.b32.cont [9/16] 0.0, 128
        %590 = vxpose.xlu0.b32.cont [10/16] 0.0, 128
        %591 = vxpose.xlu0.b32.cont [11/16] 0.0, 128
        %592 = vxpose.xlu0.b32.cont [12/16] 0.0, 128
        %593 = vxpose.xlu0.b32.cont [13/16] 0.0, 128
        %594 = vxpose.xlu0.b32.cont [14/16] 0.0, 128
        %595 = vxpose.xlu0.b32.cont [15/16] 0.0, 128
        %596 = vxpose.xlu0.b32.end [16/16] 0.0, 128
        %v597 = vpop.trf.xlu0
        %v598 = vpop.trf.xlu0
        %v599 = vpop.trf.xlu0
        %v600 = vpop.trf.xlu0
        %v601 = vpop.trf.xlu0
        %v602 = vpop.trf.xlu0
        %v603 = vpop.trf.xlu0
        %v604 = vpop.trf.xlu0
        %v605 = vpop.trf.xlu0
        %v606 = vpop.trf.xlu0
        %v607 = vpop.trf.xlu0
        %v608 = vpop.trf.xlu0
        %v609 = vpop.trf.xlu0
        %v610 = vpop.trf.xlu0
        %v611 = vpop.trf.xlu0
        %v612 = vpop.trf.xlu0
        %613 = vxpose.xlu0.b32.start [1/16] %v573, 128
        %614 = vxpose.xlu0.b32.cont [2/16] 0.0, 128
        %615 = vxpose.xlu0.b32.cont [3/16] 0.0, 128
        %616 = vxpose.xlu0.b32.cont [4/16] 0.0, 128
        %617 = vxpose.xlu0.b32.cont [5/16] 0.0, 128
        %618 = vxpose.xlu0.b32.cont [6/16] 0.0, 128
        %619 = vxpose.xlu0.b32.cont [7/16] 0.0, 128
        %620 = vxpose.xlu0.b32.cont [8/16] 0.0, 128
        %621 = vxpose.xlu0.b32.cont [9/16] 0.0, 128
        %622 = vxpose.xlu0.b32.cont [10/16] 0.0, 128
        %623 = vxpose.xlu0.b32.cont [11/16] 0.0, 128
        %624 = vxpose.xlu0.b32.cont [12/16] 0.0, 128
        %625 = vxpose.xlu0.b32.cont [13/16] 0.0, 128
        %626 = vxpose.xlu0.b32.cont [14/16] 0.0, 128
        %627 = vxpose.xlu0.b32.cont [15/16] 0.0, 128
        %628 = vxpose.xlu0.b32.end [16/16] 0.0, 128
        %v629 = vpop.trf.xlu0
        %v630 = vpop.trf.xlu0
        %v631 = vpop.trf.xlu0
        %v632 = vpop.trf.xlu0
        %v633 = vpop.trf.xlu0
        %v634 = vpop.trf.xlu0
        %v635 = vpop.trf.xlu0
        %v636 = vpop.trf.xlu0
        %v637 = vpop.trf.xlu0
        %v638 = vpop.trf.xlu0
        %v639 = vpop.trf.xlu0
        %v640 = vpop.trf.xlu0
        %v641 = vpop.trf.xlu0
        %v642 = vpop.trf.xlu0
        %v643 = vpop.trf.xlu0
        %v644 = vpop.trf.xlu0
        %v646 = vsel %vm488, %v597, 0
        %v649 = vsel %vm488, %v598, 0
        %v652 = vsel %vm488, %v599, 0
        %v655 = vsel %vm488, %v600, 0
        %v658 = vsel %vm488, %v601, 0
        %v661 = vsel %vm488, %v602, 0
        %v664 = vsel %vm488, %v603, 0
        %v667 = vsel %vm488, %v604, 0
        %v670 = vsel %vm488, %v605, 0
        %v673 = vsel %vm488, %v606, 0
        %v676 = vsel %vm488, %v607, 0
        %v679 = vsel %vm488, %v608, 0
        %v682 = vsel %vm488, %v609, 0
        %v685 = vsel %vm488, %v610, 0
        %v688 = vsel %vm488, %v611, 0
        %v691 = vsel %vm488, %v612, 0
        %v694 = vsel %vm488, %v629, 0
        %v697 = vsel %vm488, %v630, 0
        %v700 = vsel %vm488, %v631, 0
        %v703 = vsel %vm488, %v632, 0
        %v706 = vsel %vm488, %v633, 0
        %v709 = vsel %vm488, %v634, 0
        %v712 = vsel %vm488, %v635, 0
        %v715 = vsel %vm488, %v636, 0
        %v718 = vsel %vm488, %v637, 0
        %v721 = vsel %vm488, %v638, 0
        %v724 = vsel %vm488, %v639, 0
        %v727 = vsel %vm488, %v640, 0
        %v730 = vsel %vm488, %v641, 0
        %v733 = vsel %vm488, %v642, 0
        %v736 = vsel %vm488, %v643, 0
        %v739 = vsel %vm488, %v644, 0
        %741 = vmatprep.subr.mxu0 0.0
        %742 = vmatpush1.msra.mxu0 0.0
        %743 = vmatprep.subr.mxu0 0.0
        %744 = vmatpush1.msra.mxu0 0.0
        %745 = vmatprep.subr.mxu0 0.0
        %746 = vmatpush1.msra.mxu0 0.0
        %747 = vmatprep.subr.mxu0 0.0
        %748 = vmatpush1.msra.mxu0 0.0
        %749 = vmatprep.subr.mxu0 0.0
        %750 = vmatpush1.msra.mxu0 0.0
        %751 = vmatprep.subr.mxu0 0.0
        %752 = vmatpush1.msra.mxu0 0.0
        %753 = vmatprep.subr.mxu0 0.0
        %754 = vmatpush1.msra.mxu0 0.0
        %755 = vmatprep.subr.mxu0 0.0
        %756 = vmatpush1.msra.mxu0 0.0
        %757 = vmatprep.subr.mxu0 0.0
        %758 = vmatpush1.msra.mxu0 0.0
        %759 = vmatprep.subr.mxu0 0.0
        %760 = vmatpush1.msra.mxu0 0.0
        %761 = vmatprep.subr.mxu0 0.0
        %762 = vmatpush1.msra.mxu0 0.0
        %763 = vmatprep.subr.mxu0 0.0
        %764 = vmatpush1.msra.mxu0 0.0
        %765 = vmatprep.subr.mxu0 0.0
        %766 = vmatpush1.msra.mxu0 0.0
        %767 = vmatprep.subr.mxu0 0.0
        %768 = vmatpush1.msra.mxu0 0.0
        %769 = vmatprep.subr.mxu0 0.0
        %770 = vmatpush1.msra.mxu0 0.0
        %771 = vmatprep.subr.mxu0 %v567
        %772 = vmatpush1.msra.mxu0 %v565
        %773 = vmatprep.subr.mxu0 0.0
        %774 = vmatpush2.msra.mxu0 0.0
        %775 = vmatprep.subr.mxu0 0.0
        %776 = vmatpush2.msra.mxu0 0.0
        %777 = vmatprep.subr.mxu0 0.0
        %778 = vmatpush2.msra.mxu0 0.0
        %779 = vmatprep.subr.mxu0 0.0
        %780 = vmatpush2.msra.mxu0 0.0
        %781 = vmatprep.subr.mxu0 0.0
        %782 = vmatpush2.msra.mxu0 0.0
        %783 = vmatprep.subr.mxu0 0.0
        %784 = vmatpush2.msra.mxu0 0.0
        %785 = vmatprep.subr.mxu0 0.0
        %786 = vmatpush2.msra.mxu0 0.0
        %787 = vmatprep.subr.mxu0 0.0
        %788 = vmatpush2.msra.mxu0 0.0
        %789 = vmatprep.subr.mxu0 0.0
        %790 = vmatpush2.msra.mxu0 0.0
        %791 = vmatprep.subr.mxu0 0.0
        %792 = vmatpush2.msra.mxu0 0.0
        %793 = vmatprep.subr.mxu0 0.0
        %794 = vmatpush2.msra.mxu0 0.0
        %795 = vmatprep.subr.mxu0 0.0
        %796 = vmatpush2.msra.mxu0 0.0
        %797 = vmatprep.subr.mxu0 0.0
        %798 = vmatpush2.msra.mxu0 0.0
        %799 = vmatprep.subr.mxu0 0.0
        %800 = vmatpush2.msra.mxu0 0.0
        %801 = vmatprep.subr.mxu0 0.0
        %802 = vmatpush2.msra.mxu0 0.0
        %803 = vmatprep.subr.mxu0 0.0
        %804 = vmatpush2.msra.mxu0 0.0
        %805 = vmatprep.mubr.f32.mxu0 0.0
        %806 = vmatmul.mubr.f32.gmra.mxu0 %v646
        %v807 = vpop.f32.mrf.mxu0
        %v808 = vadd.f32 0.0, %v807
        %v809 = vpop.f32.mrf.mxu0
        %v810 = vadd.f32 0.0, %v809
        %811 = vmatprep.mubr.f32.mxu0 0.0
        %812 = vmatmul.mubr.f32.gmra.mxu0 %v649
        %v813 = vpop.f32.mrf.mxu0
        %v814 = vadd.f32 0.0, %v813
        %v815 = vpop.f32.mrf.mxu0
        %v816 = vadd.f32 0.0, %v815
        %817 = vmatprep.mubr.f32.mxu0 0.0
        %818 = vmatmul.mubr.f32.gmra.mxu0 %v652
        %v819 = vpop.f32.mrf.mxu0
        %v820 = vadd.f32 0.0, %v819
        %v821 = vpop.f32.mrf.mxu0
        %v822 = vadd.f32 0.0, %v821
        %823 = vmatprep.mubr.f32.mxu0 0.0
        %824 = vmatmul.mubr.f32.gmra.mxu0 %v655
        %v825 = vpop.f32.mrf.mxu0
        %v826 = vadd.f32 0.0, %v825
        %v827 = vpop.f32.mrf.mxu0
        %v828 = vadd.f32 0.0, %v827
        %829 = vmatprep.mubr.f32.mxu0 0.0
        %830 = vmatmul.mubr.f32.gmra.mxu0 %v658
        %v831 = vpop.f32.mrf.mxu0
        %v832 = vadd.f32 0.0, %v831
        %v833 = vpop.f32.mrf.mxu0
        %v834 = vadd.f32 0.0, %v833
        %835 = vmatprep.mubr.f32.mxu0 0.0
        %836 = vmatmul.mubr.f32.gmra.mxu0 %v661
        %v837 = vpop.f32.mrf.mxu0
        %v838 = vadd.f32 0.0, %v837
        %v839 = vpop.f32.mrf.mxu0
        %v840 = vadd.f32 0.0, %v839
        %841 = vmatprep.mubr.f32.mxu0 0.0
        %842 = vmatmul.mubr.f32.gmra.mxu0 %v664
        %v843 = vpop.f32.mrf.mxu0
        %v844 = vadd.f32 0.0, %v843
        %v845 = vpop.f32.mrf.mxu0
        %v846 = vadd.f32 0.0, %v845
        %847 = vmatprep.mubr.f32.mxu0 0.0
        %848 = vmatmul.mubr.f32.gmra.mxu0 %v667
        %v849 = vpop.f32.mrf.mxu0
        %v850 = vadd.f32 0.0, %v849
        %v851 = vpop.f32.mrf.mxu0
        %v852 = vadd.f32 0.0, %v851
        %853 = vmatprep.mubr.f32.mxu0 0.0
        %854 = vmatmul.mubr.f32.gmra.mxu0 %v670
        %v855 = vpop.f32.mrf.mxu0
        %v856 = vadd.f32 0.0, %v855
        %v857 = vpop.f32.mrf.mxu0
        %v858 = vadd.f32 0.0, %v857
        %859 = vmatprep.mubr.f32.mxu0 0.0
        %860 = vmatmul.mubr.f32.gmra.mxu0 %v673
        %v861 = vpop.f32.mrf.mxu0
        %v862 = vadd.f32 0.0, %v861
        %v863 = vpop.f32.mrf.mxu0
        %v864 = vadd.f32 0.0, %v863
        %865 = vmatprep.mubr.f32.mxu0 0.0
        %866 = vmatmul.mubr.f32.gmra.mxu0 %v676
        %v867 = vpop.f32.mrf.mxu0
        %v868 = vadd.f32 0.0, %v867
        %v869 = vpop.f32.mrf.mxu0
        %v870 = vadd.f32 0.0, %v869
        %871 = vmatprep.mubr.f32.mxu0 0.0
        %872 = vmatmul.mubr.f32.gmra.mxu0 %v679
        %v873 = vpop.f32.mrf.mxu0
        %v874 = vadd.f32 0.0, %v873
        %v875 = vpop.f32.mrf.mxu0
        %v876 = vadd.f32 0.0, %v875
        %877 = vmatprep.mubr.f32.mxu0 0.0
        %878 = vmatmul.mubr.f32.gmra.mxu0 %v682
        %v879 = vpop.f32.mrf.mxu0
        %v880 = vadd.f32 0.0, %v879
        %v881 = vpop.f32.mrf.mxu0
        %v882 = vadd.f32 0.0, %v881
        %883 = vmatprep.mubr.f32.mxu0 0.0
        %884 = vmatmul.mubr.f32.gmra.mxu0 %v685
        %v885 = vpop.f32.mrf.mxu0
        %v886 = vadd.f32 0.0, %v885
        %v887 = vpop.f32.mrf.mxu0
        %v888 = vadd.f32 0.0, %v887
        %889 = vmatprep.mubr.f32.mxu0 0.0
        %890 = vmatmul.mubr.f32.gmra.mxu0 %v688
        %v891 = vpop.f32.mrf.mxu0
        %v892 = vadd.f32 0.0, %v891
        %v893 = vpop.f32.mrf.mxu0
        %v894 = vadd.f32 0.0, %v893
        %895 = vmatprep.mubr.f32.mxu0 0.0
        %896 = vmatmul.mubr.f32.gmra.mxu0 %v691
        %v897 = vpop.f32.mrf.mxu0
        %v898 = vadd.f32 0.0, %v897
        %v899 = vpop.f32.mrf.mxu0
        %v900 = vadd.f32 0.0, %v899
        %901 = vmatprep.mubr.f32.mxu0 0.0
        %902 = vmatmul.mubr.f32.gmra.mxu0 %v694
        %v903 = vpop.f32.mrf.mxu0
        %v904 = vadd.f32 0.0, %v903
        %v905 = vpop.f32.mrf.mxu0
        %v906 = vadd.f32 0.0, %v905
        %907 = vmatprep.mubr.f32.mxu0 0.0
        %908 = vmatmul.mubr.f32.gmra.mxu0 %v697
        %v909 = vpop.f32.mrf.mxu0
        %v910 = vadd.f32 0.0, %v909
        %v911 = vpop.f32.mrf.mxu0
        %v912 = vadd.f32 0.0, %v911
        %913 = vmatprep.mubr.f32.mxu0 0.0
        %914 = vmatmul.mubr.f32.gmra.mxu0 %v700
        %v915 = vpop.f32.mrf.mxu0
        %v916 = vadd.f32 0.0, %v915
        %v917 = vpop.f32.mrf.mxu0
        %v918 = vadd.f32 0.0, %v917
        %919 = vmatprep.mubr.f32.mxu0 0.0
        %920 = vmatmul.mubr.f32.gmra.mxu0 %v703
        %v921 = vpop.f32.mrf.mxu0
        %v922 = vadd.f32 0.0, %v921
        %v923 = vpop.f32.mrf.mxu0
        %v924 = vadd.f32 0.0, %v923
        %925 = vmatprep.mubr.f32.mxu0 0.0
        %926 = vmatmul.mubr.f32.gmra.mxu0 %v706
        %v927 = vpop.f32.mrf.mxu0
        %v928 = vadd.f32 0.0, %v927
        %v929 = vpop.f32.mrf.mxu0
        %v930 = vadd.f32 0.0, %v929
        %931 = vmatprep.mubr.f32.mxu0 0.0
        %932 = vmatmul.mubr.f32.gmra.mxu0 %v709
        %v933 = vpop.f32.mrf.mxu0
        %v934 = vadd.f32 0.0, %v933
        %v935 = vpop.f32.mrf.mxu0
        %v936 = vadd.f32 0.0, %v935
        %937 = vmatprep.mubr.f32.mxu0 0.0
        %938 = vmatmul.mubr.f32.gmra.mxu0 %v712
        %v939 = vpop.f32.mrf.mxu0
        %v940 = vadd.f32 0.0, %v939
        %v941 = vpop.f32.mrf.mxu0
        %v942 = vadd.f32 0.0, %v941
        %943 = vmatprep.mubr.f32.mxu0 0.0
        %944 = vmatmul.mubr.f32.gmra.mxu0 %v715
        %v945 = vpop.f32.mrf.mxu0
        %v946 = vadd.f32 0.0, %v945
        %v947 = vpop.f32.mrf.mxu0
        %v948 = vadd.f32 0.0, %v947
        %949 = vmatprep.mubr.f32.mxu0 0.0
        %950 = vmatmul.mubr.f32.gmra.mxu0 %v718
        %v951 = vpop.f32.mrf.mxu0
        %v952 = vadd.f32 0.0, %v951
        %v953 = vpop.f32.mrf.mxu0
        %v954 = vadd.f32 0.0, %v953
        %955 = vmatprep.mubr.f32.mxu0 0.0
        %956 = vmatmul.mubr.f32.gmra.mxu0 %v721
        %v957 = vpop.f32.mrf.mxu0
        %v958 = vadd.f32 0.0, %v957
        %v959 = vpop.f32.mrf.mxu0
        %v960 = vadd.f32 0.0, %v959
        %961 = vmatprep.mubr.f32.mxu0 0.0
        %962 = vmatmul.mubr.f32.gmra.mxu0 %v724
        %v963 = vpop.f32.mrf.mxu0
        %v964 = vadd.f32 0.0, %v963
        %v965 = vpop.f32.mrf.mxu0
        %v966 = vadd.f32 0.0, %v965
        %967 = vmatprep.mubr.f32.mxu0 0.0
        %968 = vmatmul.mubr.f32.gmra.mxu0 %v727
        %v969 = vpop.f32.mrf.mxu0
        %v970 = vadd.f32 0.0, %v969
        %v971 = vpop.f32.mrf.mxu0
        %v972 = vadd.f32 0.0, %v971
        %973 = vmatprep.mubr.f32.mxu0 0.0
        %974 = vmatmul.mubr.f32.gmra.mxu0 %v730
        %v975 = vpop.f32.mrf.mxu0
        %v976 = vadd.f32 0.0, %v975
        %v977 = vpop.f32.mrf.mxu0
        %v978 = vadd.f32 0.0, %v977
        %979 = vmatprep.mubr.f32.mxu0 0.0
        %980 = vmatmul.mubr.f32.gmra.mxu0 %v733
        %v981 = vpop.f32.mrf.mxu0
        %v982 = vadd.f32 0.0, %v981
        %v983 = vpop.f32.mrf.mxu0
        %v984 = vadd.f32 0.0, %v983
        %985 = vmatprep.mubr.f32.mxu0 0.0
        %986 = vmatmul.mubr.f32.gmra.mxu0 %v736
        %v987 = vpop.f32.mrf.mxu0
        %v988 = vadd.f32 0.0, %v987
        %v989 = vpop.f32.mrf.mxu0
        %v990 = vadd.f32 0.0, %v989
        %991 = vmatprep.mubr.f32.mxu0 0.0
        %992 = vmatmul.mubr.f32.gmra.mxu0 %v739
        %v993 = vpop.f32.mrf.mxu0
        %v994 = vadd.f32 0.0, %v993
        %v995 = vpop.f32.mrf.mxu0
        %v996 = vadd.f32 0.0, %v995
        %997 = vdwg.mxu0
        %v998 = vmax.f32 %v808, %v820
        %v999 = vmax.f32 %v814, %v826
        %v1000 = vmax.f32 %v998, %v832
        %v1001 = vmax.f32 %v999, %v838
        %v1002 = vmax.f32 %v1000, %v844
        %v1003 = vmax.f32 %v1001, %v850
        %v1004 = vmax.f32 %v1002, %v856
        %v1005 = vmax.f32 %v1003, %v862
        %v1006 = vmax.f32 %v1004, %v868
        %v1007 = vmax.f32 %v1005, %v874
        %v1008 = vmax.f32 %v1006, %v880
        %v1009 = vmax.f32 %v1007, %v886
        %v1010 = vmax.f32 %v1008, %v892
        %v1011 = vmax.f32 %v1009, %v898
        %v1012 = vmax.f32 %v1010, %v904
        %v1013 = vmax.f32 %v1011, %v910
        %v1014 = vmax.f32 %v1012, %v916
        %v1015 = vmax.f32 %v1013, %v922
        %v1016 = vmax.f32 %v1014, %v928
        %v1017 = vmax.f32 %v1015, %v934
        %v1018 = vmax.f32 %v1016, %v940
        %v1019 = vmax.f32 %v1017, %v946
        %v1020 = vmax.f32 %v1018, %v952
        %v1021 = vmax.f32 %v1019, %v958
        %v1022 = vmax.f32 %v1020, %v964
        %v1023 = vmax.f32 %v1021, %v970
        %v1024 = vmax.f32 %v1022, %v976
        %v1025 = vmax.f32 %v1023, %v982
        %v1026 = vmax.f32 %v1024, %v988
        %v1027 = vmax.f32 %v1025, %v994
        %v1028 = vmax.f32 %v1026, %v1027
        %v1029 = vrot.slane %v1028, 4
        %v1030 = vmax.f32 %v1028, %v1029
        %v1031 = vrot.slane %v1030, 2
        %v1032 = vmax.f32 %v1030, %v1031
        %v1033 = vrot.slane %v1032, 1
        %v1034 = vmax.f32 %v1032, %v1033
        %v1035 = vmax.f32 %v810, %v822
        %v1036 = vmax.f32 %v816, %v828
        %v1037 = vmax.f32 %v1035, %v834
        %v1038 = vmax.f32 %v1036, %v840
        %v1039 = vmax.f32 %v1037, %v846
        %v1040 = vmax.f32 %v1038, %v852
        %v1041 = vmax.f32 %v1039, %v858
        %v1042 = vmax.f32 %v1040, %v864
        %v1043 = vmax.f32 %v1041, %v870
        %v1044 = vmax.f32 %v1042, %v876
        %v1045 = vmax.f32 %v1043, %v882
        %v1046 = vmax.f32 %v1044, %v888
        %v1047 = vmax.f32 %v1045, %v894
        %v1048 = vmax.f32 %v1046, %v900
        %v1049 = vmax.f32 %v1047, %v906
        %v1050 = vmax.f32 %v1048, %v912
        %v1051 = vmax.f32 %v1049, %v918
        %v1052 = vmax.f32 %v1050, %v924
        %v1053 = vmax.f32 %v1051, %v930
        %v1054 = vmax.f32 %v1052, %v936
        %v1055 = vmax.f32 %v1053, %v942
        %v1056 = vmax.f32 %v1054, %v948
        %v1057 = vmax.f32 %v1055, %v954
        %v1058 = vmax.f32 %v1056, %v960
        %v1059 = vmax.f32 %v1057, %v966
        %v1060 = vmax.f32 %v1058, %v972
        %v1061 = vmax.f32 %v1059, %v978
        %v1062 = vmax.f32 %v1060, %v984
        %v1063 = vmax.f32 %v1061, %v990
        %v1064 = vmax.f32 %v1062, %v996
        %v1065 = vmax.f32 %v1063, %v1064
        %v1066 = vrot.slane %v1065, 4
        %v1067 = vmax.f32 %v1065, %v1066
        %v1068 = vrot.slane %v1067, 2
        %v1069 = vmax.f32 %v1067, %v1068
        %v1070 = vrot.slane %v1069, 1
        %v1071 = vmax.f32 %v1069, %v1070
        %v1072 = vsub.f32 %v808, %v1034
        %v1073 = vsub.f32 %v810, %v1071
        %v1074 = vsub.f32 %v814, %v1034
        %v1075 = vsub.f32 %v816, %v1071
        %v1076 = vsub.f32 %v820, %v1034
        %v1077 = vsub.f32 %v822, %v1071
        %v1078 = vsub.f32 %v826, %v1034
        %v1079 = vsub.f32 %v828, %v1071
        %v1080 = vsub.f32 %v832, %v1034
        %v1081 = vsub.f32 %v834, %v1071
        %v1082 = vsub.f32 %v838, %v1034
        %v1083 = vsub.f32 %v840, %v1071
        %v1084 = vsub.f32 %v844, %v1034
        %v1085 = vsub.f32 %v846, %v1071
        %v1086 = vsub.f32 %v850, %v1034
        %v1087 = vsub.f32 %v852, %v1071
        %v1088 = vsub.f32 %v856, %v1034
        %v1089 = vsub.f32 %v858, %v1071
        %v1090 = vsub.f32 %v862, %v1034
        %v1091 = vsub.f32 %v864, %v1071
        %v1092 = vsub.f32 %v868, %v1034
        %v1093 = vsub.f32 %v870, %v1071
        %v1094 = vsub.f32 %v874, %v1034
        %v1095 = vsub.f32 %v876, %v1071
        %v1096 = vsub.f32 %v880, %v1034
        %v1097 = vsub.f32 %v882, %v1071
        %v1098 = vsub.f32 %v886, %v1034
        %v1099 = vsub.f32 %v888, %v1071
        %v1100 = vsub.f32 %v892, %v1034
        %v1101 = vsub.f32 %v894, %v1071
        %v1102 = vsub.f32 %v898, %v1034
        %v1103 = vsub.f32 %v900, %v1071
        %v1104 = vsub.f32 %v904, %v1034
        %v1105 = vsub.f32 %v906, %v1071
        %v1106 = vsub.f32 %v910, %v1034
        %v1107 = vsub.f32 %v912, %v1071
        %v1108 = vsub.f32 %v916, %v1034
        %v1109 = vsub.f32 %v918, %v1071
        %v1110 = vsub.f32 %v922, %v1034
        %v1111 = vsub.f32 %v924, %v1071
        %v1112 = vsub.f32 %v928, %v1034
        %v1113 = vsub.f32 %v930, %v1071
        %v1114 = vsub.f32 %v934, %v1034
        %v1115 = vsub.f32 %v936, %v1071
        %v1116 = vsub.f32 %v940, %v1034
        %v1117 = vsub.f32 %v942, %v1071
        %v1118 = vsub.f32 %v946, %v1034
        %v1119 = vsub.f32 %v948, %v1071
        %v1120 = vsub.f32 %v952, %v1034
        %v1121 = vsub.f32 %v954, %v1071
        %v1122 = vsub.f32 %v958, %v1034
        %v1123 = vsub.f32 %v960, %v1071
        %v1124 = vsub.f32 %v964, %v1034
        %v1125 = vsub.f32 %v966, %v1071
        %v1126 = vsub.f32 %v970, %v1034
        %v1127 = vsub.f32 %v972, %v1071
        %v1128 = vsub.f32 %v976, %v1034
        %v1129 = vsub.f32 %v978, %v1071
        %v1130 = vsub.f32 %v982, %v1034
        %v1131 = vsub.f32 %v984, %v1071
        %v1132 = vsub.f32 %v988, %v1034
        %v1133 = vsub.f32 %v990, %v1071
        %v1134 = vsub.f32 %v994, %v1034
        %v1135 = vsub.f32 %v996, %v1071
        %v1136 = vmul.f32 %v1072, 1.442695
        %v1137 = vpow.pop %v1136
        %v1138 = vmul.f32 %v1073, 1.442695
        %v1139 = vpow.pop %v1138
        %v1140 = vmul.f32 %v1074, 1.442695
        %v1141 = vpow.pop %v1140
        %v1142 = vmul.f32 %v1075, 1.442695
        %v1143 = vpow.pop %v1142
        %v1144 = vmul.f32 %v1076, 1.442695
        %v1145 = vpow.pop %v1144
        %v1146 = vmul.f32 %v1077, 1.442695
        %v1147 = vpow.pop %v1146
        %v1148 = vmul.f32 %v1078, 1.442695
        %v1149 = vpow.pop %v1148
        %v1150 = vmul.f32 %v1079, 1.442695
        %v1151 = vpow.pop %v1150
        %v1152 = vmul.f32 %v1080, 1.442695
        %v1153 = vpow.pop %v1152
        %v1154 = vmul.f32 %v1081, 1.442695
        %v1155 = vpow.pop %v1154
        %v1156 = vmul.f32 %v1082, 1.442695
        %v1157 = vpow.pop %v1156
        %v1158 = vmul.f32 %v1083, 1.442695
        %v1159 = vpow.pop %v1158
        %v1160 = vmul.f32 %v1084, 1.442695
        %v1161 = vpow.pop %v1160
        %v1162 = vmul.f32 %v1085, 1.442695
        %v1163 = vpow.pop %v1162
        %v1164 = vmul.f32 %v1086, 1.442695
        %v1165 = vpow.pop %v1164
        %v1166 = vmul.f32 %v1087, 1.442695
        %v1167 = vpow.pop %v1166
        %v1168 = vmul.f32 %v1088, 1.442695
        %v1169 = vpow.pop %v1168
        %v1170 = vmul.f32 %v1089, 1.442695
        %v1171 = vpow.pop %v1170
        %v1172 = vmul.f32 %v1090, 1.442695
        %v1173 = vpow.pop %v1172
        %v1174 = vmul.f32 %v1091, 1.442695
        %v1175 = vpow.pop %v1174
        %v1176 = vmul.f32 %v1092, 1.442695
        %v1177 = vpow.pop %v1176
        %v1178 = vmul.f32 %v1093, 1.442695
        %v1179 = vpow.pop %v1178
        %v1180 = vmul.f32 %v1094, 1.442695
        %v1181 = vpow.pop %v1180
        %v1182 = vmul.f32 %v1095, 1.442695
        %v1183 = vpow.pop %v1182
        %v1184 = vmul.f32 %v1096, 1.442695
        %v1185 = vpow.pop %v1184
        %v1186 = vmul.f32 %v1097, 1.442695
        %v1187 = vpow.pop %v1186
        %v1188 = vmul.f32 %v1098, 1.442695
        %v1189 = vpow.pop %v1188
        %v1190 = vmul.f32 %v1099, 1.442695
        %v1191 = vpow.pop %v1190
        %v1192 = vmul.f32 %v1100, 1.442695
        %v1193 = vpow.pop %v1192
        %v1194 = vmul.f32 %v1101, 1.442695
        %v1195 = vpow.pop %v1194
        %v1196 = vmul.f32 %v1102, 1.442695
        %v1197 = vpow.pop %v1196
        %v1198 = vmul.f32 %v1103, 1.442695
        %v1199 = vpow.pop %v1198
        %v1200 = vmul.f32 %v1104, 1.442695
        %v1201 = vpow.pop %v1200
        %v1202 = vmul.f32 %v1105, 1.442695
        %v1203 = vpow.pop %v1202
        %v1204 = vmul.f32 %v1106, 1.442695
        %v1205 = vpow.pop %v1204
        %v1206 = vmul.f32 %v1107, 1.442695
        %v1207 = vpow.pop %v1206
        %v1208 = vmul.f32 %v1108, 1.442695
        %v1209 = vpow.pop %v1208
        %v1210 = vmul.f32 %v1109, 1.442695
        %v1211 = vpow.pop %v1210
        %v1212 = vmul.f32 %v1110, 1.442695
        %v1213 = vpow.pop %v1212
        %v1214 = vmul.f32 %v1111, 1.442695
        %v1215 = vpow.pop %v1214
        %v1216 = vmul.f32 %v1112, 1.442695
        %v1217 = vpow.pop %v1216
        %v1218 = vmul.f32 %v1113, 1.442695
        %v1219 = vpow.pop %v1218
        %v1220 = vmul.f32 %v1114, 1.442695
        %v1221 = vpow.pop %v1220
        %v1222 = vmul.f32 %v1115, 1.442695
        %v1223 = vpow.pop %v1222
        %v1224 = vmul.f32 %v1116, 1.442695
        %v1225 = vpow.pop %v1224
        %v1226 = vmul.f32 %v1117, 1.442695
        %v1227 = vpow.pop %v1226
        %v1228 = vmul.f32 %v1118, 1.442695
        %v1229 = vpow.pop %v1228
        %v1230 = vmul.f32 %v1119, 1.442695
        %v1231 = vpow.pop %v1230
        %v1232 = vmul.f32 %v1120, 1.442695
        %v1233 = vpow.pop %v1232
        %v1234 = vmul.f32 %v1121, 1.442695
        %v1235 = vpow.pop %v1234
        %v1236 = vmul.f32 %v1122, 1.442695
        %v1237 = vpow.pop %v1236
        %v1238 = vmul.f32 %v1123, 1.442695
        %v1239 = vpow.pop %v1238
        %v1240 = vmul.f32 %v1124, 1.442695
        %v1241 = vpow.pop %v1240
        %v1242 = vmul.f32 %v1125, 1.442695
        %v1243 = vpow.pop %v1242
        %v1244 = vmul.f32 %v1126, 1.442695
        %v1245 = vpow.pop %v1244
        %v1246 = vmul.f32 %v1127, 1.442695
        %v1247 = vpow.pop %v1246
        %v1248 = vmul.f32 %v1128, 1.442695
        %v1249 = vpow.pop %v1248
        %v1250 = vmul.f32 %v1129, 1.442695
        %v1251 = vpow.pop %v1250
        %v1252 = vmul.f32 %v1130, 1.442695
        %v1253 = vpow.pop %v1252
        %v1254 = vmul.f32 %v1131, 1.442695
        %v1255 = vpow.pop %v1254
        %v1256 = vmul.f32 %v1132, 1.442695
        %v1257 = vpow.pop %v1256
        %v1258 = vmul.f32 %v1133, 1.442695
        %v1259 = vpow.pop %v1258
        %v1260 = vmul.f32 %v1134, 1.442695
        %v1261 = vpow.pop %v1260
        %v1262 = vmul.f32 %v1135, 1.442695
        %v1263 = vpow.pop %v1262
        %v1264 = vadd.f32 %v1137, %v1141
        %v1265 = vadd.f32 %v1264, %v1145
        %v1266 = vadd.f32 %v1265, %v1149
        %v1267 = vadd.f32 %v1266, %v1153
        %v1268 = vadd.f32 %v1267, %v1157
        %v1269 = vadd.f32 %v1268, %v1161
        %v1270 = vadd.f32 %v1269, %v1165
        %v1271 = vadd.f32 %v1270, %v1169
        %v1272 = vadd.f32 %v1271, %v1173
        %v1273 = vadd.f32 %v1272, %v1177
        %v1274 = vadd.f32 %v1273, %v1181
        %v1275 = vadd.f32 %v1274, %v1185
        %v1276 = vadd.f32 %v1275, %v1189
        %v1277 = vadd.f32 %v1276, %v1193
        %v1278 = vadd.f32 %v1277, %v1197
        %v1279 = vadd.f32 %v1278, %v1201
        %v1280 = vadd.f32 %v1279, %v1205
        %v1281 = vadd.f32 %v1280, %v1209
        %v1282 = vadd.f32 %v1281, %v1213
        %v1283 = vadd.f32 %v1282, %v1217
        %v1284 = vadd.f32 %v1283, %v1221
        %v1285 = vadd.f32 %v1284, %v1225
        %v1286 = vadd.f32 %v1285, %v1229
        %v1287 = vadd.f32 %v1286, %v1233
        %v1288 = vadd.f32 %v1287, %v1237
        %v1289 = vadd.f32 %v1288, %v1241
        %v1290 = vadd.f32 %v1289, %v1245
        %v1291 = vadd.f32 %v1290, %v1249
        %v1292 = vadd.f32 %v1291, %v1253
        %v1293 = vadd.f32 %v1292, %v1257
        %v1294 = vadd.f32 %v1293, %v1261
        %v1295 = vrot.slane %v1294, 4
        %v1296 = vadd.f32 %v1294, %v1295
        %v1297 = vrot.slane %v1296, 2
        %v1298 = vadd.f32 %v1296, %v1297
        %v1299 = vrot.slane %v1298, 1
        %v1300 = vadd.f32 %v1298, %v1299
        %v1301 = vadd.f32 %v1139, %v1143
        %v1302 = vadd.f32 %v1301, %v1147
        %v1303 = vadd.f32 %v1302, %v1151
        %v1304 = vadd.f32 %v1303, %v1155
        %v1305 = vadd.f32 %v1304, %v1159
        %v1306 = vadd.f32 %v1305, %v1163
        %v1307 = vadd.f32 %v1306, %v1167
        %v1308 = vadd.f32 %v1307, %v1171
        %v1309 = vadd.f32 %v1308, %v1175
        %v1310 = vadd.f32 %v1309, %v1179
        %v1311 = vadd.f32 %v1310, %v1183
        %v1312 = vadd.f32 %v1311, %v1187
        %v1313 = vadd.f32 %v1312, %v1191
        %v1314 = vadd.f32 %v1313, %v1195
        %v1315 = vadd.f32 %v1314, %v1199
        %v1316 = vadd.f32 %v1315, %v1203
        %v1317 = vadd.f32 %v1316, %v1207
        %v1318 = vadd.f32 %v1317, %v1211
        %v1319 = vadd.f32 %v1318, %v1215
        %v1320 = vadd.f32 %v1319, %v1219
        %v1321 = vadd.f32 %v1320, %v1223
        %v1322 = vadd.f32 %v1321, %v1227
        %v1323 = vadd.f32 %v1322, %v1231
        %v1324 = vadd.f32 %v1323, %v1235
        %v1325 = vadd.f32 %v1324, %v1239
        %v1326 = vadd.f32 %v1325, %v1243
        %v1327 = vadd.f32 %v1326, %v1247
        %v1328 = vadd.f32 %v1327, %v1251
        %v1329 = vadd.f32 %v1328, %v1255
        %v1330 = vadd.f32 %v1329, %v1259
        %v1331 = vadd.f32 %v1330, %v1263
        %v1332 = vrot.slane %v1331, 4
        %v1333 = vadd.f32 %v1331, %v1332
        %v1334 = vrot.slane %v1333, 2
        %v1335 = vadd.f32 %v1333, %v1334
        %v1336 = vrot.slane %v1335, 1
        %v1337 = vadd.f32 %v1335, %v1336
        %1338 = vmatprep.subr.mxu0 %v1199
        %1339 = vmatpush1.msra.mxu0 %v1197
        %1340 = vmatprep.subr.mxu0 %v1195
        %1341 = vmatpush1.msra.mxu0 %v1193
        %1342 = vmatprep.subr.mxu0 %v1191
        %1343 = vmatpush1.msra.mxu0 %v1189
        %1344 = vmatprep.subr.mxu0 %v1187
        %1345 = vmatpush1.msra.mxu0 %v1185
        %1346 = vmatprep.subr.mxu0 %v1183
        %1347 = vmatpush1.msra.mxu0 %v1181
        %1348 = vmatprep.subr.mxu0 %v1179
        %1349 = vmatpush1.msra.mxu0 %v1177
        %1350 = vmatprep.subr.mxu0 %v1175
        %1351 = vmatpush1.msra.mxu0 %v1173
        %1352 = vmatprep.subr.mxu0 %v1171
        %1353 = vmatpush1.msra.mxu0 %v1169
        %1354 = vmatprep.subr.mxu0 %v1167
        %1355 = vmatpush1.msra.mxu0 %v1165
        %1356 = vmatprep.subr.mxu0 %v1163
        %1357 = vmatpush1.msra.mxu0 %v1161
        %1358 = vmatprep.subr.mxu0 %v1159
        %1359 = vmatpush1.msra.mxu0 %v1157
        %1360 = vmatprep.subr.mxu0 %v1155
        %1361 = vmatpush1.msra.mxu0 %v1153
        %1362 = vmatprep.subr.mxu0 %v1151
        %1363 = vmatpush1.msra.mxu0 %v1149
        %1364 = vmatprep.subr.mxu0 %v1147
        %1365 = vmatpush1.msra.mxu0 %v1145
        %1366 = vmatprep.subr.mxu0 %v1143
        %1367 = vmatpush1.msra.mxu0 %v1141
        %1368 = vmatprep.subr.mxu0 %v1139
        %1369 = vmatpush1.msra.mxu0 %v1137
        %1370 = vmatprep.subr.mxu0 %v1263
        %1371 = vmatpush2.msra.mxu0 %v1261
        %1372 = vmatprep.subr.mxu0 %v1259
        %1373 = vmatpush2.msra.mxu0 %v1257
        %1374 = vmatprep.subr.mxu0 %v1255
        %1375 = vmatpush2.msra.mxu0 %v1253
        %1376 = vmatprep.subr.mxu0 %v1251
        %1377 = vmatpush2.msra.mxu0 %v1249
        %1378 = vmatprep.subr.mxu0 %v1247
        %1379 = vmatpush2.msra.mxu0 %v1245
        %1380 = vmatprep.subr.mxu0 %v1243
        %1381 = vmatpush2.msra.mxu0 %v1241
        %1382 = vmatprep.subr.mxu0 %v1239
        %1383 = vmatpush2.msra.mxu0 %v1237
        %1384 = vmatprep.subr.mxu0 %v1235
        %1385 = vmatpush2.msra.mxu0 %v1233
        %1386 = vmatprep.subr.mxu0 %v1231
        %1387 = vmatpush2.msra.mxu0 %v1229
        %1388 = vmatprep.subr.mxu0 %v1227
        %1389 = vmatpush2.msra.mxu0 %v1225
        %1390 = vmatprep.subr.mxu0 %v1223
        %1391 = vmatpush2.msra.mxu0 %v1221
        %1392 = vmatprep.subr.mxu0 %v1219
        %1393 = vmatpush2.msra.mxu0 %v1217
        %1394 = vmatprep.subr.mxu0 %v1215
        %1395 = vmatpush2.msra.mxu0 %v1213
        %1396 = vmatprep.subr.mxu0 %v1211
        %1397 = vmatpush2.msra.mxu0 %v1209
        %1398 = vmatprep.subr.mxu0 %v1207
        %1399 = vmatpush2.msra.mxu0 %v1205
        %1400 = vmatprep.subr.mxu0 %v1203
        %1401 = vmatpush2.msra.mxu0 %v1201
        %1402 = vmatprep.mubr.f32.mxu0 %v579
        %1403 = vmatmul.mubr.f32.gmra.mxu0 %v577
        %v1404 = vpop.f32.mrf.mxu0
        %v1405 = vadd.f32 0.0, %v1404
        %v1406 = vpop.f32.mrf.mxu0
        %v1407 = vadd.f32 0.0, %v1406
        %1408 = vdwg.mxu0
        %v1409 = vrcp.pop %v1300
        %v1410 = vmul.f32 %v1405, %v1409
        %v1411 = vrcp.pop %v1337
        %v1412 = vmul.f32 %v1407, %v1411
        %1414 = vset.pattern.permute.xlu0 0
        %1415 = vperm.xlu0 %1414, %v356
        %v1416 = vpop.permute.xlu0 %1415
        %v1419 = vsel %vm488, %v352, 0
        %1421 = vmatprep.subr.mxu0 0.0
        %1422 = vmatpush1.msra.mxu0 0.0
        %1423 = vmatprep.subr.mxu0 0.0
        %1424 = vmatpush1.msra.mxu0 0.0
        %1425 = vmatprep.subr.mxu0 0.0
        %1426 = vmatpush1.msra.mxu0 0.0
        %1427 = vmatprep.subr.mxu0 0.0
        %1428 = vmatpush1.msra.mxu0 0.0
        %1429 = vmatprep.subr.mxu0 0.0
        %1430 = vmatpush1.msra.mxu0 0.0
        %1431 = vmatprep.subr.mxu0 0.0
        %1432 = vmatpush1.msra.mxu0 0.0
        %1433 = vmatprep.subr.mxu0 0.0
        %1434 = vmatpush1.msra.mxu0 0.0
        %1435 = vmatprep.subr.mxu0 0.0
        %1436 = vmatpush1.msra.mxu0 0.0
        %1437 = vmatprep.subr.mxu0 0.0
        %1438 = vmatpush1.msra.mxu0 0.0
        %1439 = vmatprep.subr.mxu0 0.0
        %1440 = vmatpush1.msra.mxu0 0.0
        %1441 = vmatprep.subr.mxu0 0.0
        %1442 = vmatpush1.msra.mxu0 0.0
        %1443 = vmatprep.subr.mxu0 0.0
        %1444 = vmatpush1.msra.mxu0 0.0
        %1445 = vmatprep.subr.mxu0 0.0
        %1446 = vmatpush1.msra.mxu0 0.0
        %1447 = vmatprep.subr.mxu0 0.0
        %1448 = vmatpush1.msra.mxu0 0.0
        %1449 = vmatprep.subr.mxu0 0.0
        %1450 = vmatpush1.msra.mxu0 0.0
        %1451 = vmatprep.subr.mxu0 %v1412
        %1452 = vmatpush1.msra.mxu0 %v1410
        %1453 = vmatprep.subr.mxu0 0.0
        %1454 = vmatpush2.msra.mxu0 0.0
        %1455 = vmatprep.subr.mxu0 0.0
        %1456 = vmatpush2.msra.mxu0 0.0
        %1457 = vmatprep.subr.mxu0 0.0
        %1458 = vmatpush2.msra.mxu0 0.0
        %1459 = vmatprep.subr.mxu0 0.0
        %1460 = vmatpush2.msra.mxu0 0.0
        %1461 = vmatprep.subr.mxu0 0.0
        %1462 = vmatpush2.msra.mxu0 0.0
        %1463 = vmatprep.subr.mxu0 0.0
        %1464 = vmatpush2.msra.mxu0 0.0
        %1465 = vmatprep.subr.mxu0 0.0
        %1466 = vmatpush2.msra.mxu0 0.0
        %1467 = vmatprep.subr.mxu0 0.0
        %1468 = vmatpush2.msra.mxu0 0.0
        %1469 = vmatprep.subr.mxu0 0.0
        %1470 = vmatpush2.msra.mxu0 0.0
        %1471 = vmatprep.subr.mxu0 0.0
        %1472 = vmatpush2.msra.mxu0 0.0
        %1473 = vmatprep.subr.mxu0 0.0
        %1474 = vmatpush2.msra.mxu0 0.0
        %1475 = vmatprep.subr.mxu0 0.0
        %1476 = vmatpush2.msra.mxu0 0.0
        %1477 = vmatprep.subr.mxu0 0.0
        %1478 = vmatpush2.msra.mxu0 0.0
        %1479 = vmatprep.subr.mxu0 0.0
        %1480 = vmatpush2.msra.mxu0 0.0
        %1481 = vmatprep.subr.mxu0 0.0
        %1482 = vmatpush2.msra.mxu0 0.0
        %1483 = vmatprep.subr.mxu0 0.0
        %1484 = vmatpush2.msra.mxu0 0.0
        %1485 = vmatprep.mubr.f32.mxu0 0.0
        %1486 = vmatmul.mubr.f32.gmra.mxu0 %v1419
        %v1487 = vpop.f32.mrf.mxu0
        %v1488 = vadd.f32 %v1416, %v1487
        %v1489 = vpop.f32.mrf.mxu0
        %v1490 = vadd.f32 %v1416, %v1489
        %1491 = vdwg.mxu0
        %1493 = vset.pattern.permute.xlu0 0
        %1494 = vperm.xlu0 %1493, %v358
        %v1495 = vpop.permute.xlu0 %1494
        %v1498 = vsel %vm384, %v347, 0
        %1500 = vmatprep.subr.mxu0 0.0
        %1501 = vmatpush1.msra.mxu0 0.0
        %1502 = vmatprep.subr.mxu0 0.0
        %1503 = vmatpush1.msra.mxu0 0.0
        %1504 = vmatprep.subr.mxu0 0.0
        %1505 = vmatpush1.msra.mxu0 0.0
        %1506 = vmatprep.subr.mxu0 0.0
        %1507 = vmatpush1.msra.mxu0 0.0
        %1508 = vmatprep.subr.mxu0 0.0
        %1509 = vmatpush1.msra.mxu0 0.0
        %1510 = vmatprep.subr.mxu0 0.0
        %1511 = vmatpush1.msra.mxu0 0.0
        %1512 = vmatprep.subr.mxu0 0.0
        %1513 = vmatpush1.msra.mxu0 0.0
        %1514 = vmatprep.subr.mxu0 0.0
        %1515 = vmatpush1.msra.mxu0 0.0
        %1516 = vmatprep.subr.mxu0 0.0
        %1517 = vmatpush1.msra.mxu0 0.0
        %1518 = vmatprep.subr.mxu0 0.0
        %1519 = vmatpush1.msra.mxu0 0.0
        %1520 = vmatprep.subr.mxu0 0.0
        %1521 = vmatpush1.msra.mxu0 0.0
        %1522 = vmatprep.subr.mxu0 0.0
        %1523 = vmatpush1.msra.mxu0 0.0
        %1524 = vmatprep.subr.mxu0 0.0
        %1525 = vmatpush1.msra.mxu0 0.0
        %1526 = vmatprep.subr.mxu0 0.0
        %1527 = vmatpush1.msra.mxu0 0.0
        %1528 = vmatprep.subr.mxu0 %v1490
        %1529 = vmatpush1.msra.mxu0 %v1488
        %1530 = vmatprep.subr.mxu0 %v472
        %1531 = vmatpush1.msra.mxu0 %v471
        %1532 = vmatprep.subr.mxu0 0.0
        %1533 = vmatpush2.msra.mxu0 0.0
        %1534 = vmatprep.subr.mxu0 0.0
        %1535 = vmatpush2.msra.mxu0 0.0
        %1536 = vmatprep.subr.mxu0 0.0
        %1537 = vmatpush2.msra.mxu0 0.0
        %1538 = vmatprep.subr.mxu0 0.0
        %1539 = vmatpush2.msra.mxu0 0.0
        %1540 = vmatprep.subr.mxu0 0.0
        %1541 = vmatpush2.msra.mxu0 0.0
        %1542 = vmatprep.subr.mxu0 0.0
        %1543 = vmatpush2.msra.mxu0 0.0
        %1544 = vmatprep.subr.mxu0 0.0
        %1545 = vmatpush2.msra.mxu0 0.0
        %1546 = vmatprep.subr.mxu0 0.0
        %1547 = vmatpush2.msra.mxu0 0.0
        %1548 = vmatprep.subr.mxu0 0.0
        %1549 = vmatpush2.msra.mxu0 0.0
        %1550 = vmatprep.subr.mxu0 0.0
        %1551 = vmatpush2.msra.mxu0 0.0
        %1552 = vmatprep.subr.mxu0 0.0
        %1553 = vmatpush2.msra.mxu0 0.0
        %1554 = vmatprep.subr.mxu0 0.0
        %1555 = vmatpush2.msra.mxu0 0.0
        %1556 = vmatprep.subr.mxu0 0.0
        %1557 = vmatpush2.msra.mxu0 0.0
        %1558 = vmatprep.subr.mxu0 0.0
        %1559 = vmatpush2.msra.mxu0 0.0
        %1560 = vmatprep.subr.mxu0 0.0
        %1561 = vmatpush2.msra.mxu0 0.0
        %1562 = vmatprep.subr.mxu0 0.0
        %1563 = vmatpush2.msra.mxu0 0.0
        %1564 = vmatprep.mubr.f32.mxu0 0.0
        %1565 = vmatmul.mubr.f32.gmra.mxu0 %v1498
        %v1566 = vpop.f32.mrf.mxu0
        %v1567 = vadd.f32 %v1495, %v1566
        %v1568 = vpop.f32.mrf.mxu0
        %v1569 = vadd.f32 %v1495, %v1568
        %1570 = vdwg.mxu0
        %v1571 = vadd.f32 %v1567, %v1569
        %1572 = vadd.xlane.f32.xlu0 %v1571
        %v1573 = vpop.xlane.xlu0 %1572
        %v1574 = vmul.f32 %v1573, %v363
        %v1575 = vsub.f32 %v1567, %v1574
        %v1576 = vsub.f32 %v1569, %v1574
        %v1577 = vmul.f32 %v1575, %v1575
        %v1578 = vmul.f32 %v1576, %v1576
        %v1579 = vadd.f32 %v1577, %v1578
        %1580 = vadd.xlane.f32.xlu0 %v1579
        %v1581 = vpop.xlane.xlu0 %1580
        %v1582 = vmul.f32 %v1581, %v363
        %v1583 = vadd.f32 %v1582, 1e-05
        %v1584 = vrsqrt.pop %v1583
        %v1585 = vmul.f32 %v1575, %v1584
        %v1586 = vmul.f32 %v1576, %v1584
        %v1587 = vmax.f32 %v1585, 0.0
        %v1588 = vmax.f32 %v1586, 0.0
        %1589 = vst [vmem:[%s317] sm:$0xff] %v1587
        %1590 = vst [vmem:[%s317 + $0x8] sm:$0xff] %v1588
        %1592 = vset.pattern.permute.xlu0 0
        %1593 = vperm.xlu0 %1592, %v359
        %v1594 = vpop.permute.xlu0 %1593
        %v1597 = vsel %vm488, %v348, 0
        %1599 = vmatprep.subr.mxu0 0.0
        %1600 = vmatpush1.msra.mxu0 0.0
        %1601 = vmatprep.subr.mxu0 0.0
        %1602 = vmatpush1.msra.mxu0 0.0
        %1603 = vmatprep.subr.mxu0 0.0
        %1604 = vmatpush1.msra.mxu0 0.0
        %1605 = vmatprep.subr.mxu0 0.0
        %1606 = vmatpush1.msra.mxu0 0.0
        %1607 = vmatprep.subr.mxu0 0.0
        %1608 = vmatpush1.msra.mxu0 0.0
        %1609 = vmatprep.subr.mxu0 0.0
        %1610 = vmatpush1.msra.mxu0 0.0
        %1611 = vmatprep.subr.mxu0 0.0
        %1612 = vmatpush1.msra.mxu0 0.0
        %1613 = vmatprep.subr.mxu0 0.0
        %1614 = vmatpush1.msra.mxu0 0.0
        %1615 = vmatprep.subr.mxu0 0.0
        %1616 = vmatpush1.msra.mxu0 0.0
        %1617 = vmatprep.subr.mxu0 0.0
        %1618 = vmatpush1.msra.mxu0 0.0
        %1619 = vmatprep.subr.mxu0 0.0
        %1620 = vmatpush1.msra.mxu0 0.0
        %1621 = vmatprep.subr.mxu0 0.0
        %1622 = vmatpush1.msra.mxu0 0.0
        %1623 = vmatprep.subr.mxu0 0.0
        %1624 = vmatpush1.msra.mxu0 0.0
        %1625 = vmatprep.subr.mxu0 0.0
        %1626 = vmatpush1.msra.mxu0 0.0
        %1627 = vmatprep.subr.mxu0 0.0
        %1628 = vmatpush1.msra.mxu0 0.0
        %1629 = vmatprep.subr.mxu0 %v1588
        %1630 = vmatpush1.msra.mxu0 %v1587
        %1631 = vmatprep.subr.mxu0 0.0
        %1632 = vmatpush2.msra.mxu0 0.0
        %1633 = vmatprep.subr.mxu0 0.0
        %1634 = vmatpush2.msra.mxu0 0.0
        %1635 = vmatprep.subr.mxu0 0.0
        %1636 = vmatpush2.msra.mxu0 0.0
        %1637 = vmatprep.subr.mxu0 0.0
        %1638 = vmatpush2.msra.mxu0 0.0
        %1639 = vmatprep.subr.mxu0 0.0
        %1640 = vmatpush2.msra.mxu0 0.0
        %1641 = vmatprep.subr.mxu0 0.0
        %1642 = vmatpush2.msra.mxu0 0.0
        %1643 = vmatprep.subr.mxu0 0.0
        %1644 = vmatpush2.msra.mxu0 0.0
        %1645 = vmatprep.subr.mxu0 0.0
        %1646 = vmatpush2.msra.mxu0 0.0
        %1647 = vmatprep.subr.mxu0 0.0
        %1648 = vmatpush2.msra.mxu0 0.0
        %1649 = vmatprep.subr.mxu0 0.0
        %1650 = vmatpush2.msra.mxu0 0.0
        %1651 = vmatprep.subr.mxu0 0.0
        %1652 = vmatpush2.msra.mxu0 0.0
        %1653 = vmatprep.subr.mxu0 0.0
        %1654 = vmatpush2.msra.mxu0 0.0
        %1655 = vmatprep.subr.mxu0 0.0
        %1656 = vmatpush2.msra.mxu0 0.0
        %1657 = vmatprep.subr.mxu0 0.0
        %1658 = vmatpush2.msra.mxu0 0.0
        %1659 = vmatprep.subr.mxu0 0.0
        %1660 = vmatpush2.msra.mxu0 0.0
        %1661 = vmatprep.subr.mxu0 0.0
        %1662 = vmatpush2.msra.mxu0 0.0
        %1663 = vmatprep.mubr.f32.mxu0 0.0
        %1664 = vmatmul.mubr.f32.gmra.mxu0 %v1597
        %v1665 = vpop.f32.mrf.mxu0
        %v1666 = vadd.f32 %v1594, %v1665
        %v1667 = vpop.f32.mrf.mxu0
        %v1668 = vadd.f32 %v1594, %v1667
        %1669 = vdwg.mxu0
        %v1670 = vsub.f32 0.0, %v1666
        %v1671 = vsub.f32 0.0, %v1668
        %v1672 = vmul.f32 %v1670, 1.442695
        %v1673 = vpow.pop %v1672
        %v1674 = vmul.f32 %v1671, 1.442695
        %v1675 = vpow.pop %v1674
        %v1676 = vadd.f32 %v1673, 1.0
        %v1677 = vadd.f32 %v1675, 1.0
        %v1678 = vrcp.pop %v1676
        %v1679 = vrcp.pop %v1677
        %v1682 = vcombine.low %v1678, %v1679
        %v1684 = vunpack.c.l.s4 1966171168
        %v1685 = vunpack.c.0.s8 %v1684
        %v1686 = vlaneseq
        %v1687 = vshrl.u32 %v1686, 7
        %v1688 = vsub.s32 %v1685, %v1687
        %v1689 = vrot.slane %v1682, %v1688
        %v1691 = vunpack.c.l.s4 1966171168
        %v1692 = vunpack.c.0.s8 %v1691
        %v1693 = vlaneseq
        %v1694 = vshrl.u32 %v1693, 7
        %v1695 = vsub.s32 %v1692, %v1694
        %v1696 = vrot.slane %v1689, %v1695
        %v1698 = vlaneseq
        %vm1699 = vcmp.ge.s32.totalorder %v1698, 0
        %vm1700 = vcmp.lt.s32.totalorder %v1698, 256
        %vm1701 = vmand %vm1699, %vm1700
        %1702 = vst.msk [vmem:[%s331] sm:$0x3] %vm1701, %v1696
        %s1703 = sand.u32 %s170, 1
        %s1704 = scalar_lea.sflag [#allocation3], %s1703
        %s1705 = sand.u32 %s170, 1
        %s1706 = smul.addr %s1705, 16
        %s1707 = scalar_lea.vmem [#allocation2], %s1706
        %s1708 = sand.u32 %s26, 1
        %s1709 = scalar_lea.sflag [#allocation5], %s1708
        %s1710 = sand.u32 %s196, 1
        %s1711 = smul.addr %s1710, 16
        %s1712 = scalar_lea.vmem [#allocation4], %s1711
        %s1713 = sand.u32 %s26, 1
        %s1714 = scalar_lea.sflag [#allocation5], %s1713
        %s1715 = sand.u32 %s222, 1
        %s1716 = smul.addr %s1715, 2
        %s1717 = scalar_lea.vmem [#allocation6], %s1716
        // Predicated region
        $region45: #{tpu_custom_call.1} parent=43 // pred_check
          %p1718 = pneg %p180
        $region46: #{tpu_custom_call.1} parent=43 // pred_check_branch
          %1720 = sbr.rel (%p1718) target = $region48
        $region47: #{tpu_custom_call.1} parent=43 // pred_region
          %s1722 = ssub.s32 256, 256
          %1723 = vsyncadd %s1704, %s1722
          %s1724 = smul.addr %s26, 2
          %s1725 = smul.addr %s1724, 128
          %s1726 = scalar_lea.hbm %s6, %s1725
          %s1728 = sshll.u32 %s1707, 4
          %s1729 = int_to_ptr.vmem [resolvable:$true] %s1728
          %1731 = dma.vmem_to_hbm [thread:$0]  %s1729, 256, %s1726, %s1704
        $region48: #{tpu_custom_call.1} parent=43 // pred_fallthru
          _
        // Predicated region
        $region49: #{tpu_custom_call.1} parent=43 // pred_check
          %p1732 = pneg %p206
        $region50: #{tpu_custom_call.1} parent=43 // pred_check_branch
          %1734 = sbr.rel (%p1732) target = $region52
        $region51: #{tpu_custom_call.1} parent=43 // pred_region
          %s1736 = ssub.s32 256, 256
          %1737 = vsyncadd %s1709, %s1736
          %s1738 = smul.addr %s26, 2
          %s1739 = smul.addr %s1738, 128
          %s1740 = scalar_lea.hbm %s7, %s1739
          %s1742 = sshll.u32 %s1712, 4
          %s1743 = int_to_ptr.vmem [resolvable:$true] %s1742
          %1745 = dma.vmem_to_hbm [thread:$0]  %s1743, 256, %s1740, %s1709
        $region52: #{tpu_custom_call.1} parent=43 // pred_fallthru
          _
        // Predicated region
        $region53: #{tpu_custom_call.1} parent=43 // pred_check
          %p1746 = pneg %p232
        $region54: #{tpu_custom_call.1} parent=43 // pred_check_branch
          %1748 = sbr.rel (%p1746) target = $region56
        $region55: #{tpu_custom_call.1} parent=43 // pred_region
          %s1750 = ssub.s32 32, 32
          %1751 = vsyncadd %s1714, %s1750
          %s1752 = smul.addr %s26, 2
          %s1753 = smul.addr %s1752, 16
          %s1754 = scalar_lea.hbm %s8, %s1753
          %s1756 = sshll.u32 %s1717, 4
          %s1757 = int_to_ptr.vmem [resolvable:$true] %s1756
          %1759 = dma.vmem_to_hbm [thread:$0]  %s1757, 32, %s1754, %s1714
        $region56: #{tpu_custom_call.1} parent=43 // pred_fallthru
          _
      $region44: #{tpu_custom_call.1} parent=5 // pred_fallthru
        _
      %p1760 = scmp.le.s32.totalorder 2, %s21
      // Predicated region
      $region57: #{tpu_custom_call.1} parent=5 // pred_check
        %p1761 = pneg %p1760
      $region58: #{tpu_custom_call.1} parent=5 // pred_check_branch
        %1763 = sbr.rel (%p1761) target = $region60
      $region59: #{tpu_custom_call.1} parent=5 // pred_region
        %s1764 = ssub.s32 %s21, 2
        // Predicated region
        $region61: #{tpu_custom_call.1} parent=59 // pred_check
          %p1765 = pneg %p186
        $region62: #{tpu_custom_call.1} parent=59 // pred_check_branch
          %1767 = sbr.rel (%p1765) target = $region64
        $region63: #{tpu_custom_call.1} parent=59 // pred_region
          %s1768 = sand.u32 %s171, 1
          %s1769 = scalar_lea.sflag [#allocation3], %s1768
          %s1770 = sand.u32 %s171, 1
          %s1771 = smul.addr %s1770, 16
          %s1772 = scalar_lea.vmem [#allocation2], %s1771
          %1773 = dma.done %s1769, 256
        $region64: #{tpu_custom_call.1} parent=59 // pred_fallthru
          _
        // Predicated region
        $region65: #{tpu_custom_call.1} parent=59 // pred_check
          %p1774 = pneg %p212
        $region66: #{tpu_custom_call.1} parent=59 // pred_check_branch
          %1776 = sbr.rel (%p1774) target = $region68
        $region67: #{tpu_custom_call.1} parent=59 // pred_region
          %s1777 = sand.u32 %s27, 1
          %s1778 = scalar_lea.sflag [#allocation5], %s1777
          %s1779 = sand.u32 %s197, 1
          %s1780 = smul.addr %s1779, 16
          %s1781 = scalar_lea.vmem [#allocation4], %s1780
          %1782 = dma.done %s1778, 256
        $region68: #{tpu_custom_call.1} parent=59 // pred_fallthru
          _
        // Predicated region
        $region69: #{tpu_custom_call.1} parent=59 // pred_check
          %p1783 = pneg %p238
        $region70: #{tpu_custom_call.1} parent=59 // pred_check_branch
          %1785 = sbr.rel (%p1783) target = $region72
        $region71: #{tpu_custom_call.1} parent=59 // pred_region
          %s1786 = sand.u32 %s27, 1
          %s1787 = scalar_lea.sflag [#allocation5], %s1786
          %s1788 = sand.u32 %s223, 1
          %s1789 = smul.addr %s1788, 2
          %s1790 = scalar_lea.vmem [#allocation6], %s1789
          %1791 = dma.done %s1787, 32
        $region72: #{tpu_custom_call.1} parent=59 // pred_fallthru
          _
      $region60: #{tpu_custom_call.1} parent=5 // pred_fallthru
        _
    $region6: #{tpu_custom_call.1} parent=1 // loop_footer
      %s25 = sadd.s32 1, %s21
    $region7: #{tpu_custom_call.1} parent=1 // loop_footer_branch
      %20 = sbr.rel target = $region3
    $region8: #{tpu_custom_call.1} parent=1 // loop_exit
      _
    %1792 = vsyncpa [#allocation3], 1
    %s1793 = scalar_lea.sflag [#allocation3], 1
    %1794 = vsyncpa %s1793, 1
    %1795 = vsyncpa [#allocation5], 1
    %s1796 = scalar_lea.sflag [#allocation5], 1
    %1797 = vsyncpa %s1796, 1

</llo_original>
